<compile_context>
chip_gen: v5e
topology: v5e:2x2
jax: 0.10.0
libtpu: 0.0.40
codegen_flags: <defaults>
</compile_context>

<pallas_src>
import functools
import math

import jax
import jax.numpy as jnp
from jax.experimental import pallas as pl
from jax.experimental.pallas import tpu as pltpu


def _attention_layer_kernel(
    x_ref, y_ref,
    wq_ref, wkv_ref, wo_ref,
    bq_ref, bkv_ref, bo_ref,
    gamma_ref, beta_ref,
    out_ref, attn_ref,
    kv_ref, ctx_ref,
    *, n_heads: int, eps: float, mxu_dtype, approx_softmax: bool,
):
  TQ, D = x_ref.shape[1], x_ref.shape[2]
  d_head = D // n_heads
  scale = 1.0 / math.sqrt(d_head)
  qi = pl.program_id(1)

  gamma = gamma_ref[...].astype(jnp.float32)   # (1, D)
  beta = beta_ref[...].astype(jnp.float32)     # (1, D)

  def layer_norm(t):
    mean = jnp.mean(t, axis=-1, keepdims=True)
    var = jnp.mean((t - mean) ** 2, axis=-1, keepdims=True)
    # rsqrt runs on the EUP slot (free vs. a VALU divide).
    return (t - mean) * jax.lax.rsqrt(var + eps) * gamma + beta

  # ---- K|V cache: LayerNorm(y) + fused K|V projection, once per batch row ---
  # qi is the innermost ("arbitrary", sequential) grid axis, so this scratch is
  # filled at qi == 0 and stays valid for every later query tile of the same b.
  @pl.when(qi == 0)
  def _fill_kv_cache():
    yn = layer_norm(y_ref[0].astype(jnp.float32))                   # (S, D)
    kv = jnp.dot(yn.astype(mxu_dtype), wkv_ref[...],
                 preferred_element_type=jnp.float32) + bkv_ref[...]  # (S, 2D)
    kv_ref[...] = kv.astype(kv_ref.dtype)

  # ---- Q projection for this query tile --------------------------------------
  x = x_ref[0].astype(jnp.float32)                                   # (TQ, D)
  xn = layer_norm(x)
  q = jnp.dot(xn.astype(mxu_dtype), wq_ref[...],
              preferred_element_type=jnp.float32) + bq_ref[...]      # (TQ, D)
  # Pre-scale Q once (cheaper than scaling H (TQ, S) score tiles).
  qm = (q * scale).astype(mxu_dtype)

  # ---- per-head attention, streamed stores ------------------------------------
  for h in range(n_heads):
    lo = h * d_head
    hi = lo + d_head
    q_h = qm[:, lo:hi]                    # (TQ, d_head)
    k_h = kv_ref[:, lo:hi]                # (S,  d_head)  cached, mxu_dtype
    v_h = kv_ref[:, D + lo:D + hi]        # (S,  d_head)

    # Q K^T without materializing a transpose.
    scores = jax.lax.dot_general(
        q_h, k_h, (((1,), (1,)), ((), ())),
        preferred_element_type=jnp.float32)                          # (TQ, S)
    scores = scores - jnp.max(scores, axis=-1, keepdims=True)
    e = jnp.exp(scores)
    a = e * pl.reciprocal(jnp.sum(e, axis=-1, keepdims=True),
                          approx=approx_softmax)

    # Stream this head's results out immediately (frees live ranges).
    attn_ref[0, h, :, :] = a.astype(attn_ref.dtype)
    ctx_ref[:, lo:hi] = jnp.dot(a.astype(mxu_dtype), v_h,
                                preferred_element_type=jnp.float32)

  out = jnp.dot(ctx_ref[...].astype(mxu_dtype), wo_ref[...],
                preferred_element_type=jnp.float32) + bo_ref[...]    # (TQ, D)
  out_ref[0] = (out + x).astype(out_ref.dtype)


def attention_layer(x, y, params, *, n_heads: int, eps: float = 1e-6,
                    mxu_dtype=jnp.bfloat16, attn_dtype=jnp.bfloat16,
                    approx_softmax: bool = True, q_tile: int | None = None):
  """Fused pre-LN multi-head attention layer.

  x, y: (B, S, D) float32.
  params: dict with wq/wk/wv/wo (D, D), bq/bk/bv/bo (1, D), gamma/beta (1, D).
  Returns (out (B, S, D), attention (B, H, S, S) in attn_dtype).
  """
  B, S, D = x.shape
  assert y.shape == (B, S, D)
  assert D % n_heads == 0

  if q_tile is not None:
    TQ = q_tile
  elif S % 256 == 0:
    TQ = 256          # fills the 256-wide MXU M dim on v6e/v7x (use 128 on v5e)
  elif S % 128 == 0:
    TQ = 128
  else:
    TQ = S
  assert S % TQ == 0
  n_q = S // TQ

  # Host-side weight prep: fuse K/V weights; cast weights to the MXU operand
  # dtype (halves their VMEM footprint in bf16 mode). Biases/LN params stay f32.
  w_dt = mxu_dtype
  wq = params["wq"].astype(w_dt)
  wkv = jnp.concatenate([params["wk"], params["wv"]], axis=1).astype(w_dt)
  wo = params["wo"].astype(w_dt)
  bq = params["bq"].astype(jnp.float32)
  bkv = jnp.concatenate([params["bk"], params["bv"]], axis=1).astype(jnp.float32)
  bo = params["bo"].astype(jnp.float32)
  gamma = params["gamma"].astype(jnp.float32)
  beta = params["beta"].astype(jnp.float32)

  kernel = functools.partial(
      _attention_layer_kernel,
      n_heads=n_heads, eps=eps, mxu_dtype=mxu_dtype,
      approx_softmax=approx_softmax)

  # Constant-index blocks: single-buffer (index_map never changes, so double
  # buffering only doubles their VMEM with zero overlap benefit).
  def const_spec(shape):
    return pl.BlockSpec(shape, lambda b, qi: (0,) * len(shape),
                        pipeline_mode=pl.Buffered(1))

  wbytes = jnp.dtype(w_dt).itemsize
  abytes = jnp.dtype(attn_dtype).itemsize
  # Explicit VMEM budget from the actual block set (+25% headroom), so v5e's
  # 16 MiB default scoped limit does not force tiny tiles.
  vmem_bytes = (
      2 * (TQ * D * 4)                    # x tile (double-buffered)
      + 2 * (S * D * 4)                   # y block (double-buffered)
      + 2 * (TQ * D * 4)                  # out tile
      + 2 * (n_heads * TQ * S * abytes)   # attention tile
      + 4 * D * D * wbytes                # wq + wkv + wo (single-buffered)
      + 8 * D * 4                         # biases / gamma / beta
      + S * 2 * D * wbytes                # K|V cache scratch
      + TQ * D * 4                        # ctx scratch
  )
  vmem_limit = int(min(100 * 1024 * 1024,
                       max(vmem_bytes * 5 // 4, 32 * 1024 * 1024)))

  flops = B * (8 * S * D * D + 4 * S * S * D)
  transcendentals = B * n_heads * S * S + 2 * B * S
  bytes_accessed = (3 * B * S * D * 4
                    + B * n_heads * S * S * abytes
                    + 4 * D * D * wbytes)

  out, attn = pl.pallas_call(
      kernel,
      out_shape=(
          jax.ShapeDtypeStruct((B, S, D), x.dtype),
          jax.ShapeDtypeStruct((B, n_heads, S, S), attn_dtype),
      ),
      grid_spec=pltpu.PrefetchScalarGridSpec(
          num_scalar_prefetch=0,
          grid=(B, n_q),
          in_specs=[
              pl.BlockSpec((1, TQ, D), lambda b, qi: (b, qi, 0)),   # x query tile
              pl.BlockSpec((1, S, D), lambda b, qi: (b, 0, 0)),     # y full rows
              const_spec((D, D)),        # wq
              const_spec((D, 2 * D)),    # wkv (fused K|V)
              const_spec((D, D)),        # wo
              const_spec((1, D)),        # bq
              const_spec((1, 2 * D)),    # bkv
              const_spec((1, D)),        # bo
              const_spec((1, D)),        # gamma
              const_spec((1, D)),        # beta
          ],
          out_specs=[
              pl.BlockSpec((1, TQ, D), lambda b, qi: (b, qi, 0)),
              pl.BlockSpec((1, n_heads, TQ, S), lambda b, qi: (b, 0, qi, 0)),
          ],
          scratch_shapes=[
              pltpu.VMEM((S, 2 * D), mxu_dtype),    # per-b K|V cache
              pltpu.VMEM((TQ, D), jnp.float32),     # ctx accumulator
          ]),
      compiler_params=pltpu.CompilerParams(
          dimension_semantics=("parallel", "arbitrary"),
          vmem_limit_bytes=vmem_limit),
      cost_estimate=pl.CostEstimate(
          flops=flops, transcendentals=transcendentals,
          bytes_accessed=bytes_accessed),
  )(x, y, wq, wkv, wo, bq, bkv, bo, gamma, beta)
  return out, attn


def _reference(x, y, params, *, n_heads: int, eps: float = 1e-6):
  """Pure-JAX reference mirroring the PyTorch module (layer_norm_first=True)."""
  def ln(t):
    mean = jnp.mean(t, axis=-1, keepdims=True)
    var = jnp.mean((t - mean) ** 2, axis=-1, keepdims=True)
    return (t - mean) / jnp.sqrt(var + eps) * params["gamma"][0] + params["beta"][0]

  B, S, D = x.shape
  dh = D // n_heads
  xn, yn = ln(x), ln(y)
  q = xn @ params["wq"] + params["bq"][0]
  k = yn @ params["wk"] + params["bk"][0]
  v = yn @ params["wv"] + params["bv"][0]
  q = q.reshape(B, S, n_heads, dh).transpose(0, 2, 1, 3)
  k = k.reshape(B, S, n_heads, dh).transpose(0, 2, 1, 3)
  v = v.reshape(B, S, n_heads, dh).transpose(0, 2, 1, 3)
  scores = jnp.einsum("bhqd,bhkd->bhqk", q, k) / math.sqrt(dh)
  attn = jax.nn.softmax(scores, axis=-1)
  ctx = jnp.einsum("bhqk,bhkd->bhqd", attn, v)
  ctx = ctx.transpose(0, 2, 1, 3).reshape(B, S, D)
  out = ctx @ params["wo"] + params["bo"][0]
  return out + x, attn


if __name__ == "__main__":
  B, S, D, H = 2, 8, 32, 4   # batch, seq, d_embed, n_heads
  key = jax.random.PRNGKey(0)
  keys = jax.random.split(key, 10)

  scale = 1.0 / math.sqrt(D)
  params = {
      "wq": jax.random.normal(keys[0], (D, D), jnp.float32) * scale,
      "wk": jax.random.normal(keys[1], (D, D), jnp.float32) * scale,
      "wv": jax.random.normal(keys[2], (D, D), jnp.float32) * scale,
      "wo": jax.random.normal(keys[3], (D, D), jnp.float32) * scale,
      "bq": jax.random.normal(keys[4], (1, D), jnp.float32) * 0.02,
      "bk": jax.random.normal(keys[5], (1, D), jnp.float32) * 0.02,
      "bv": jax.random.normal(keys[6], (1, D), jnp.float32) * 0.02,
      "bo": jnp.zeros((1, D), jnp.float32),
      "gamma": jnp.ones((1, D), jnp.float32),   # LayerNorm init: ones
      "beta": jnp.zeros((1, D), jnp.float32),   # LayerNorm init: zeros
  }

  x = jax.random.normal(keys[7], (B, S, D), jnp.float32)
  y = jax.random.normal(keys[8], (B, S, D), jnp.float32)

  out_want, attn_want = _reference(x, y, params, n_heads=H)

  # Fast path (default): bf16 MXU operands, bf16 attention writeback,
  # approximate softmax reciprocal.
  out, attn = attention_layer(x, y, params, n_heads=H)
  out = jax.block_until_ready(out)
  attn = jax.block_until_ready(attn)
  assert out.shape == (B, S, D) and attn.shape == (B, H, S, S)
  assert jnp.allclose(out, out_want, atol=5e-2, rtol=5e-2)
  assert jnp.allclose(attn.astype(jnp.float32), attn_want, atol=5e-2, rtol=5e-2)

  # Exact path: f32 MXU operands, f32 attention output, exact reciprocal.
  out32, attn32 = attention_layer(
      x, y, params, n_heads=H, mxu_dtype=jnp.float32,
      attn_dtype=jnp.float32, approx_softmax=False)
  out32 = jax.block_until_ready(out32)
  attn32 = jax.block_until_ready(attn32)
  assert jnp.allclose(out32, out_want, atol=1e-3, rtol=1e-3)
  assert jnp.allclose(attn32, attn_want, atol=1e-3, rtol=1e-3)

  print("KERNEL_OK")
</pallas_src>

<mosaic_0001>
module attributes {stable_mosaic.version = 11 : i64} {
  func.func @_attention_layer_kernel(%arg0: i32, %arg1: i32, %arg2: memref<1x8x32xf32, #tpu.memory_space<vmem>>, %arg3: memref<1x8x32xf32, #tpu.memory_space<vmem>>, %arg4: memref<32x32xbf16, #tpu.memory_space<vmem>>, %arg5: memref<32x64xbf16, #tpu.memory_space<vmem>>, %arg6: memref<32x32xbf16, #tpu.memory_space<vmem>>, %arg7: memref<1x32xf32, #tpu.memory_space<vmem>>, %arg8: memref<1x64xf32, #tpu.memory_space<vmem>>, %arg9: memref<1x32xf32, #tpu.memory_space<vmem>>, %arg10: memref<1x32xf32, #tpu.memory_space<vmem>>, %arg11: memref<1x32xf32, #tpu.memory_space<vmem>>, %arg12: memref<1x8x32xf32, #tpu.memory_space<vmem>>, %arg13: memref<1x4x8x8xbf16, #tpu.memory_space<vmem>>, %arg14: memref<8x64xbf16, #tpu.memory_space<vmem>>, %arg15: memref<8x32xf32, #tpu.memory_space<vmem>>) attributes {dimension_semantics = [#tpu.dimension_semantics<parallel>, #tpu.dimension_semantics<arbitrary>], iteration_bounds = array<i64: 2, 1>, scalar_prefetch = 0 : i64, scratch_operands = 2 : i64, tpu.core_type = #tpu.core_type<tc>, window_params = [{transform_indices = @transform_0, window_bounds = array<i64: 1, 8, 32>}, {transform_indices = @transform_1, window_bounds = array<i64: 1, 8, 32>}, {pipeline_mode = #tpu.pipeline_mode<synchronous>, transform_indices = @transform_2, window_bounds = array<i64: 32, 32>}, {pipeline_mode = #tpu.pipeline_mode<synchronous>, transform_indices = @transform_3, window_bounds = array<i64: 32, 64>}, {pipeline_mode = #tpu.pipeline_mode<synchronous>, transform_indices = @transform_4, window_bounds = array<i64: 32, 32>}, {pipeline_mode = #tpu.pipeline_mode<synchronous>, transform_indices = @transform_5, window_bounds = array<i64: 1, 32>}, {pipeline_mode = #tpu.pipeline_mode<synchronous>, transform_indices = @transform_6, window_bounds = array<i64: 1, 64>}, {pipeline_mode = #tpu.pipeline_mode<synchronous>, transform_indices = @transform_7, window_bounds = array<i64: 1, 32>}, {pipeline_mode = #tpu.pipeline_mode<synchronous>, transform_indices = @transform_8, window_bounds = array<i64: 1, 32>}, {pipeline_mode = #tpu.pipeline_mode<synchronous>, transform_indices = @transform_9, window_bounds = array<i64: 1, 32>}, {transform_indices = @transform_10, window_bounds = array<i64: 1, 8, 32>}, {transform_indices = @transform_11, window_bounds = array<i64: 1, 4, 8, 8>}]} {
    %c0 = arith.constant 0 : index
    %c0_0 = arith.constant 0 : index
    %0 = vector.load %arg10[%c0, %c0_0] : memref<1x32xf32, #tpu.memory_space<vmem>>, vector<1x32xf32>
    %c0_1 = arith.constant 0 : index
    %c0_2 = arith.constant 0 : index
    %1 = vector.load %arg11[%c0_1, %c0_2] : memref<1x32xf32, #tpu.memory_space<vmem>>, vector<1x32xf32>
    %c0_i32 = arith.constant 0 : i32
    %2 = arith.cmpi eq, %arg1, %c0_i32 : i32
    %3 = arith.extui %2 : i1 to i32
    %c0_i32_3 = arith.constant 0 : i32
    %4 = arith.cmpi ne, %3, %c0_i32_3 : i32
    scf.if %4 {
      %c0_73 = arith.constant 0 : index
      %c0_74 = arith.constant 0 : index
      %c0_75 = arith.constant 0 : index
      %133 = vector.load %arg3[%c0_73, %c0_74, %c0_75] : memref<1x8x32xf32, #tpu.memory_space<vmem>>, vector<1x8x32xf32>
      %134 = vector.shape_cast %133 : vector<1x8x32xf32> to vector<8x32xf32>
      %cst_76 = arith.constant dense<0.000000e+00> : vector<8xf32>
      %135 = vector.multi_reduction <add>, %134, %cst_76 [1] : vector<8x32xf32> to vector<8xf32>
      %136 = vector.shape_cast %135 : vector<8xf32> to vector<8x1xf32>
      %cst_77 = arith.constant 3.200000e+01 : f32
      %137 = vector.broadcast %cst_77 : f32 to vector<8x1xf32>
      %138 = arith.divf %136, %137 : vector<8x1xf32>
      %139 = vector.broadcast %138 : vector<8x1xf32> to vector<8x32xf32>
      %140 = arith.subf %134, %139 : vector<8x32xf32>
      %141 = arith.mulf %140, %140 : vector<8x32xf32>
      %cst_78 = arith.constant dense<0.000000e+00> : vector<8xf32>
      %142 = vector.multi_reduction <add>, %141, %cst_78 [1] : vector<8x32xf32> to vector<8xf32>
      %143 = vector.shape_cast %142 : vector<8xf32> to vector<8x1xf32>
      %cst_79 = arith.constant 3.200000e+01 : f32
      %144 = vector.broadcast %cst_79 : f32 to vector<8x1xf32>
      %145 = arith.divf %143, %144 : vector<8x1xf32>
      %146 = vector.broadcast %138 : vector<8x1xf32> to vector<8x32xf32>
      %147 = arith.subf %134, %146 : vector<8x32xf32>
      %cst_80 = arith.constant 9.99999997E-7 : f32
      %148 = vector.broadcast %cst_80 : f32 to vector<8x1xf32>
      %149 = arith.addf %145, %148 : vector<8x1xf32>
      %150 = math.rsqrt %149 : vector<8x1xf32>
      %151 = vector.broadcast %150 : vector<8x1xf32> to vector<8x32xf32>
      %152 = arith.mulf %147, %151 : vector<8x32xf32>
      %153 = vector.broadcast %0 : vector<1x32xf32> to vector<8x32xf32>
      %154 = arith.mulf %152, %153 : vector<8x32xf32>
      %155 = vector.broadcast %1 : vector<1x32xf32> to vector<8x32xf32>
      %156 = arith.addf %154, %155 : vector<8x32xf32>
      %157 = arith.truncf %156 : vector<8x32xf32> to vector<8x32xbf16>
      %c0_81 = arith.constant 0 : index
      %c0_82 = arith.constant 0 : index
      %158 = vector.load %arg5[%c0_81, %c0_82] : memref<32x64xbf16, #tpu.memory_space<vmem>>, vector<32x64xbf16>
      %cst_83 = arith.constant dense<0.000000e+00> : vector<8x64xf32>
      %159 = tpu.matmul %157, %158, %cst_83 {dimension_numbers = #tpu.dot_dimension_numbers<[1], [0], [0], [1], [0, 0, 1, 1], [], []>} : vector<8x32xbf16>, vector<32x64xbf16>, vector<8x64xf32> -> vector<8x64xf32>
      %c0_84 = arith.constant 0 : index
      %c0_85 = arith.constant 0 : index
      %160 = vector.load %arg8[%c0_84, %c0_85] : memref<1x64xf32, #tpu.memory_space<vmem>>, vector<1x64xf32>
      %161 = vector.broadcast %160 : vector<1x64xf32> to vector<8x64xf32>
      %162 = arith.addf %159, %161 : vector<8x64xf32>
      %163 = arith.truncf %162 : vector<8x64xf32> to vector<8x64xbf16>
      %c0_86 = arith.constant 0 : index
      %c0_87 = arith.constant 0 : index
      %164 = vector.load %arg14[%c0_86, %c0_87] : memref<8x64xbf16, #tpu.memory_space<vmem>>, vector<8x64xbf16>
      tpu.vector_store %arg14[%c0_86, %c0_87], %163 {strides = array<i32>} : memref<8x64xbf16, #tpu.memory_space<vmem>>, vector<8x64xbf16>,
    } else {
    }
    %c0_4 = arith.constant 0 : index
    %c0_5 = arith.constant 0 : index
    %c0_6 = arith.constant 0 : index
    %5 = vector.load %arg2[%c0_4, %c0_5, %c0_6] : memref<1x8x32xf32, #tpu.memory_space<vmem>>, vector<1x8x32xf32>
    %6 = vector.shape_cast %5 : vector<1x8x32xf32> to vector<8x32xf32>
    %cst = arith.constant dense<0.000000e+00> : vector<8xf32>
    %7 = vector.multi_reduction <add>, %6, %cst [1] : vector<8x32xf32> to vector<8xf32>
    %8 = vector.shape_cast %7 : vector<8xf32> to vector<8x1xf32>
    %cst_7 = arith.constant 3.200000e+01 : f32
    %9 = vector.broadcast %cst_7 : f32 to vector<8x1xf32>
    %10 = arith.divf %8, %9 : vector<8x1xf32>
    %11 = vector.broadcast %10 : vector<8x1xf32> to vector<8x32xf32>
    %12 = arith.subf %6, %11 : vector<8x32xf32>
    %13 = arith.mulf %12, %12 : vector<8x32xf32>
    %cst_8 = arith.constant dense<0.000000e+00> : vector<8xf32>
    %14 = vector.multi_reduction <add>, %13, %cst_8 [1] : vector<8x32xf32> to vector<8xf32>
    %15 = vector.shape_cast %14 : vector<8xf32> to vector<8x1xf32>
    %cst_9 = arith.constant 3.200000e+01 : f32
    %16 = vector.broadcast %cst_9 : f32 to vector<8x1xf32>
    %17 = arith.divf %15, %16 : vector<8x1xf32>
    %18 = vector.broadcast %10 : vector<8x1xf32> to vector<8x32xf32>
    %19 = arith.subf %6, %18 : vector<8x32xf32>
    %cst_10 = arith.constant 9.99999997E-7 : f32
    %20 = vector.broadcast %cst_10 : f32 to vector<8x1xf32>
    %21 = arith.addf %17, %20 : vector<8x1xf32>
    %22 = math.rsqrt %21 : vector<8x1xf32>
    %23 = vector.broadcast %22 : vector<8x1xf32> to vector<8x32xf32>
    %24 = arith.mulf %19, %23 : vector<8x32xf32>
    %25 = vector.broadcast %0 : vector<1x32xf32> to vector<8x32xf32>
    %26 = arith.mulf %24, %25 : vector<8x32xf32>
    %27 = vector.broadcast %1 : vector<1x32xf32> to vector<8x32xf32>
    %28 = arith.addf %26, %27 : vector<8x32xf32>
    %29 = arith.truncf %28 : vector<8x32xf32> to vector<8x32xbf16>
    %c0_11 = arith.constant 0 : index
    %c0_12 = arith.constant 0 : index
    %30 = vector.load %arg4[%c0_11, %c0_12] : memref<32x32xbf16, #tpu.memory_space<vmem>>, vector<32x32xbf16>
    %cst_13 = arith.constant dense<0.000000e+00> : vector<8x32xf32>
    %31 = tpu.matmul %29, %30, %cst_13 {dimension_numbers = #tpu.dot_dimension_numbers<[1], [0], [0], [1], [0, 0, 1, 1], [], []>} : vector<8x32xbf16>, vector<32x32xbf16>, vector<8x32xf32> -> vector<8x32xf32>
    %c0_14 = arith.constant 0 : index
    %c0_15 = arith.constant 0 : index
    %32 = vector.load %arg7[%c0_14, %c0_15] : memref<1x32xf32, #tpu.memory_space<vmem>>, vector<1x32xf32>
    %33 = vector.broadcast %32 : vector<1x32xf32> to vector<8x32xf32>
    %34 = arith.addf %31, %33 : vector<8x32xf32>
    %cst_16 = arith.constant 0.353553385 : f32
    %35 = vector.broadcast %cst_16 : f32 to vector<8x32xf32>
    %36 = arith.mulf %34, %35 : vector<8x32xf32>
    %37 = arith.truncf %36 : vector<8x32xf32> to vector<8x32xbf16>
    %38 = vector.extract_strided_slice %37 {offsets = [0, 0], sizes = [8, 8], strides = [1, 1]} : vector<8x32xbf16> to vector<8x8xbf16>
    %c0_17 = arith.constant 0 : index
    %c0_18 = arith.constant 0 : index
    %39 = vector.load %arg14[%c0_17, %c0_18] : memref<8x64xbf16, #tpu.memory_space<vmem>>, vector<8x8xbf16>
    %c0_19 = arith.constant 0 : index
    %c32 = arith.constant 32 : index
    %40 = vector.load %arg14[%c0_19, %c32] : memref<8x64xbf16, #tpu.memory_space<vmem>>, vector<8x8xbf16>
    %cst_20 = arith.constant dense<0.000000e+00> : vector<8x8xf32>
    %41 = tpu.matmul %38, %39, %cst_20 {dimension_numbers = #tpu.dot_dimension_numbers<[1], [1], [0], [0], [0, 0, 1, 0], [], []>} : vector<8x8xbf16>, vector<8x8xbf16>, vector<8x8xf32> -> vector<8x8xf32>
    %cst_21 = arith.constant dense<0xFF800000> : vector<8xf32>
    %42 = vector.multi_reduction <maximumf>, %41, %cst_21 [1] : vector<8x8xf32> to vector<8xf32>
    %43 = vector.shape_cast %42 : vector<8xf32> to vector<8x1xf32>
    %44 = vector.broadcast %43 : vector<8x1xf32> to vector<8x8xf32>
    %45 = arith.subf %41, %44 : vector<8x8xf32>
    %46 = math.exp %45 : vector<8x8xf32>
    %cst_22 = arith.constant dense<0.000000e+00> : vector<8xf32>
    %47 = vector.multi_reduction <add>, %46, %cst_22 [1] : vector<8x8xf32> to vector<8xf32>
    %48 = vector.shape_cast %47 : vector<8xf32> to vector<8x1xf32>
    %49 = tpu.reciprocal %48 {approx = true} : vector<8x1xf32> -> vector<8x1xf32>
    %50 = vector.broadcast %49 : vector<8x1xf32> to vector<8x8xf32>
    %51 = arith.mulf %46, %50 : vector<8x8xf32>
    %52 = arith.truncf %51 : vector<8x8xf32> to vector<8x8xbf16>
    %c0_23 = arith.constant 0 : index
    %c0_24 = arith.constant 0 : index
    %c0_25 = arith.constant 0 : index
    %c0_26 = arith.constant 0 : index
    %53 = vector.load %arg13[%c0_23, %c0_24, %c0_25, %c0_26] : memref<1x4x8x8xbf16, #tpu.memory_space<vmem>>, vector<1x1x8x8xbf16>
    %54 = vector.shape_cast %53 : vector<1x1x8x8xbf16> to vector<8x8xbf16>
    %55 = vector.shape_cast %52 : vector<8x8xbf16> to vector<1x1x8x8xbf16>
    tpu.vector_store %arg13[%c0_23, %c0_24, %c0_25, %c0_26], %55 {strides = array<i32>} : memref<1x4x8x8xbf16, #tpu.memory_space<vmem>>, vector<1x1x8x8xbf16>,
    %56 = arith.truncf %51 : vector<8x8xf32> to vector<8x8xbf16>
    %cst_27 = arith.constant dense<0.000000e+00> : vector<8x8xf32>
    %57 = tpu.matmul %56, %40, %cst_27 {dimension_numbers = #tpu.dot_dimension_numbers<[1], [0], [0], [1], [0, 0, 1, 1], [], []>} : vector<8x8xbf16>, vector<8x8xbf16>, vector<8x8xf32> -> vector<8x8xf32>
    %c0_28 = arith.constant 0 : index
    %c0_29 = arith.constant 0 : index
    %58 = vector.load %arg15[%c0_28, %c0_29] : memref<8x32xf32, #tpu.memory_space<vmem>>, vector<8x8xf32>
    tpu.vector_store %arg15[%c0_28, %c0_29], %57 {strides = array<i32>} : memref<8x32xf32, #tpu.memory_space<vmem>>, vector<8x8xf32>,
    %59 = vector.extract_strided_slice %37 {offsets = [0, 8], sizes = [8, 8], strides = [1, 1]} : vector<8x32xbf16> to vector<8x8xbf16>
    %c0_30 = arith.constant 0 : index
    %c8 = arith.constant 8 : index
    %60 = vector.load %arg14[%c0_30, %c8] : memref<8x64xbf16, #tpu.memory_space<vmem>>, vector<8x8xbf16>
    %c0_31 = arith.constant 0 : index
    %c40 = arith.constant 40 : index
    %61 = vector.load %arg14[%c0_31, %c40] : memref<8x64xbf16, #tpu.memory_space<vmem>>, vector<8x8xbf16>
    %cst_32 = arith.constant dense<0.000000e+00> : vector<8x8xf32>
    %62 = tpu.matmul %59, %60, %cst_32 {dimension_numbers = #tpu.dot_dimension_numbers<[1], [1], [0], [0], [0, 0, 1, 0], [], []>} : vector<8x8xbf16>, vector<8x8xbf16>, vector<8x8xf32> -> vector<8x8xf32>
    %cst_33 = arith.constant dense<0xFF800000> : vector<8xf32>
    %63 = vector.multi_reduction <maximumf>, %62, %cst_33 [1] : vector<8x8xf32> to vector<8xf32>
    %64 = vector.shape_cast %63 : vector<8xf32> to vector<8x1xf32>
    %65 = vector.broadcast %64 : vector<8x1xf32> to vector<8x8xf32>
    %66 = arith.subf %62, %65 : vector<8x8xf32>
    %67 = math.exp %66 : vector<8x8xf32>
    %cst_34 = arith.constant dense<0.000000e+00> : vector<8xf32>
    %68 = vector.multi_reduction <add>, %67, %cst_34 [1] : vector<8x8xf32> to vector<8xf32>
    %69 = vector.shape_cast %68 : vector<8xf32> to vector<8x1xf32>
    %70 = tpu.reciprocal %69 {approx = true} : vector<8x1xf32> -> vector<8x1xf32>
    %71 = vector.broadcast %70 : vector<8x1xf32> to vector<8x8xf32>
    %72 = arith.mulf %67, %71 : vector<8x8xf32>
    %73 = arith.truncf %72 : vector<8x8xf32> to vector<8x8xbf16>
    %c0_35 = arith.constant 0 : index
    %c1 = arith.constant 1 : index
    %c0_36 = arith.constant 0 : index
    %c0_37 = arith.constant 0 : index
    %74 = vector.load %arg13[%c0_35, %c1, %c0_36, %c0_37] : memref<1x4x8x8xbf16, #tpu.memory_space<vmem>>, vector<1x1x8x8xbf16>
    %75 = vector.shape_cast %74 : vector<1x1x8x8xbf16> to vector<8x8xbf16>
    %76 = vector.shape_cast %73 : vector<8x8xbf16> to vector<1x1x8x8xbf16>
    tpu.vector_store %arg13[%c0_35, %c1, %c0_36, %c0_37], %76 {strides = array<i32>} : memref<1x4x8x8xbf16, #tpu.memory_space<vmem>>, vector<1x1x8x8xbf16>,
    %77 = arith.truncf %72 : vector<8x8xf32> to vector<8x8xbf16>
    %cst_38 = arith.constant dense<0.000000e+00> : vector<8x8xf32>
    %78 = tpu.matmul %77, %61, %cst_38 {dimension_numbers = #tpu.dot_dimension_numbers<[1], [0], [0], [1], [0, 0, 1, 1], [], []>} : vector<8x8xbf16>, vector<8x8xbf16>, vector<8x8xf32> -> vector<8x8xf32>
    %c0_39 = arith.constant 0 : index
    %c8_40 = arith.constant 8 : index
    %79 = vector.load %arg15[%c0_39, %c8_40] : memref<8x32xf32, #tpu.memory_space<vmem>>, vector<8x8xf32>
    tpu.vector_store %arg15[%c0_39, %c8_40], %78 {strides = array<i32>} : memref<8x32xf32, #tpu.memory_space<vmem>>, vector<8x8xf32>,
    %80 = vector.extract_strided_slice %37 {offsets = [0, 16], sizes = [8, 8], strides = [1, 1]} : vector<8x32xbf16> to vector<8x8xbf16>
    %c0_41 = arith.constant 0 : index
    %c16 = arith.constant 16 : index
    %81 = vector.load %arg14[%c0_41, %c16] : memref<8x64xbf16, #tpu.memory_space<vmem>>, vector<8x8xbf16>
    %c0_42 = arith.constant 0 : index
    %c48 = arith.constant 48 : index
    %82 = vector.load %arg14[%c0_42, %c48] : memref<8x64xbf16, #tpu.memory_space<vmem>>, vector<8x8xbf16>
    %cst_43 = arith.constant dense<0.000000e+00> : vector<8x8xf32>
    %83 = tpu.matmul %80, %81, %cst_43 {dimension_numbers = #tpu.dot_dimension_numbers<[1], [1], [0], [0], [0, 0, 1, 0], [], []>} : vector<8x8xbf16>, vector<8x8xbf16>, vector<8x8xf32> -> vector<8x8xf32>
    %cst_44 = arith.constant dense<0xFF800000> : vector<8xf32>
    %84 = vector.multi_reduction <maximumf>, %83, %cst_44 [1] : vector<8x8xf32> to vector<8xf32>
    %85 = vector.shape_cast %84 : vector<8xf32> to vector<8x1xf32>
    %86 = vector.broadcast %85 : vector<8x1xf32> to vector<8x8xf32>
    %87 = arith.subf %83, %86 : vector<8x8xf32>
    %88 = math.exp %87 : vector<8x8xf32>
    %cst_45 = arith.constant dense<0.000000e+00> : vector<8xf32>
    %89 = vector.multi_reduction <add>, %88, %cst_45 [1] : vector<8x8xf32> to vector<8xf32>
    %90 = vector.shape_cast %89 : vector<8xf32> to vector<8x1xf32>
    %91 = tpu.reciprocal %90 {approx = true} : vector<8x1xf32> -> vector<8x1xf32>
    %92 = vector.broadcast %91 : vector<8x1xf32> to vector<8x8xf32>
    %93 = arith.mulf %88, %92 : vector<8x8xf32>
    %94 = arith.truncf %93 : vector<8x8xf32> to vector<8x8xbf16>
    %c0_46 = arith.constant 0 : index
    %c2 = arith.constant 2 : index
    %c0_47 = arith.constant 0 : index
    %c0_48 = arith.constant 0 : index
    %95 = vector.load %arg13[%c0_46, %c2, %c0_47, %c0_48] : memref<1x4x8x8xbf16, #tpu.memory_space<vmem>>, vector<1x1x8x8xbf16>
    %96 = vector.shape_cast %95 : vector<1x1x8x8xbf16> to vector<8x8xbf16>
    %97 = vector.shape_cast %94 : vector<8x8xbf16> to vector<1x1x8x8xbf16>
    tpu.vector_store %arg13[%c0_46, %c2, %c0_47, %c0_48], %97 {strides = array<i32>} : memref<1x4x8x8xbf16, #tpu.memory_space<vmem>>, vector<1x1x8x8xbf16>,
    %98 = arith.truncf %93 : vector<8x8xf32> to vector<8x8xbf16>
    %cst_49 = arith.constant dense<0.000000e+00> : vector<8x8xf32>
    %99 = tpu.matmul %98, %82, %cst_49 {dimension_numbers = #tpu.dot_dimension_numbers<[1], [0], [0], [1], [0, 0, 1, 1], [], []>} : vector<8x8xbf16>, vector<8x8xbf16>, vector<8x8xf32> -> vector<8x8xf32>
    %c0_50 = arith.constant 0 : index
    %c16_51 = arith.constant 16 : index
    %100 = vector.load %arg15[%c0_50, %c16_51] : memref<8x32xf32, #tpu.memory_space<vmem>>, vector<8x8xf32>
    tpu.vector_store %arg15[%c0_50, %c16_51], %99 {strides = array<i32>} : memref<8x32xf32, #tpu.memory_space<vmem>>, vector<8x8xf32>,
    %101 = vector.extract_strided_slice %37 {offsets = [0, 24], sizes = [8, 8], strides = [1, 1]} : vector<8x32xbf16> to vector<8x8xbf16>
    %c0_52 = arith.constant 0 : index
    %c24 = arith.constant 24 : index
    %102 = vector.load %arg14[%c0_52, %c24] : memref<8x64xbf16, #tpu.memory_space<vmem>>, vector<8x8xbf16>
    %c0_53 = arith.constant 0 : index
    %c56 = arith.constant 56 : index
    %103 = vector.load %arg14[%c0_53, %c56] : memref<8x64xbf16, #tpu.memory_space<vmem>>, vector<8x8xbf16>
    %cst_54 = arith.constant dense<0.000000e+00> : vector<8x8xf32>
    %104 = tpu.matmul %101, %102, %cst_54 {dimension_numbers = #tpu.dot_dimension_numbers<[1], [1], [0], [0], [0, 0, 1, 0], [], []>} : vector<8x8xbf16>, vector<8x8xbf16>, vector<8x8xf32> -> vector<8x8xf32>
    %cst_55 = arith.constant dense<0xFF800000> : vector<8xf32>
    %105 = vector.multi_reduction <maximumf>, %104, %cst_55 [1] : vector<8x8xf32> to vector<8xf32>
    %106 = vector.shape_cast %105 : vector<8xf32> to vector<8x1xf32>
    %107 = vector.broadcast %106 : vector<8x1xf32> to vector<8x8xf32>
    %108 = arith.subf %104, %107 : vector<8x8xf32>
    %109 = math.exp %108 : vector<8x8xf32>
    %cst_56 = arith.constant dense<0.000000e+00> : vector<8xf32>
    %110 = vector.multi_reduction <add>, %109, %cst_56 [1] : vector<8x8xf32> to vector<8xf32>
    %111 = vector.shape_cast %110 : vector<8xf32> to vector<8x1xf32>
    %112 = tpu.reciprocal %111 {approx = true} : vector<8x1xf32> -> vector<8x1xf32>
    %113 = vector.broadcast %112 : vector<8x1xf32> to vector<8x8xf32>
    %114 = arith.mulf %109, %113 : vector<8x8xf32>
    %115 = arith.truncf %114 : vector<8x8xf32> to vector<8x8xbf16>
    %c0_57 = arith.constant 0 : index
    %c3 = arith.constant 3 : index
    %c0_58 = arith.constant 0 : index
    %c0_59 = arith.constant 0 : index
    %116 = vector.load %arg13[%c0_57, %c3, %c0_58, %c0_59] : memref<1x4x8x8xbf16, #tpu.memory_space<vmem>>, vector<1x1x8x8xbf16>
    %117 = vector.shape_cast %116 : vector<1x1x8x8xbf16> to vector<8x8xbf16>
    %118 = vector.shape_cast %115 : vector<8x8xbf16> to vector<1x1x8x8xbf16>
    tpu.vector_store %arg13[%c0_57, %c3, %c0_58, %c0_59], %118 {strides = array<i32>} : memref<1x4x8x8xbf16, #tpu.memory_space<vmem>>, vector<1x1x8x8xbf16>,
    %119 = arith.truncf %114 : vector<8x8xf32> to vector<8x8xbf16>
    %cst_60 = arith.constant dense<0.000000e+00> : vector<8x8xf32>
    %120 = tpu.matmul %119, %103, %cst_60 {dimension_numbers = #tpu.dot_dimension_numbers<[1], [0], [0], [1], [0, 0, 1, 1], [], []>} : vector<8x8xbf16>, vector<8x8xbf16>, vector<8x8xf32> -> vector<8x8xf32>
    %c0_61 = arith.constant 0 : index
    %c24_62 = arith.constant 24 : index
    %121 = vector.load %arg15[%c0_61, %c24_62] : memref<8x32xf32, #tpu.memory_space<vmem>>, vector<8x8xf32>
    tpu.vector_store %arg15[%c0_61, %c24_62], %120 {strides = array<i32>} : memref<8x32xf32, #tpu.memory_space<vmem>>, vector<8x8xf32>,
    %c0_63 = arith.constant 0 : index
    %c0_64 = arith.constant 0 : index
    %122 = vector.load %arg15[%c0_63, %c0_64] : memref<8x32xf32, #tpu.memory_space<vmem>>, vector<8x32xf32>
    %123 = arith.truncf %122 : vector<8x32xf32> to vector<8x32xbf16>
    %c0_65 = arith.constant 0 : index
    %c0_66 = arith.constant 0 : index
    %124 = vector.load %arg6[%c0_65, %c0_66] : memref<32x32xbf16, #tpu.memory_space<vmem>>, vector<32x32xbf16>
    %cst_67 = arith.constant dense<0.000000e+00> : vector<8x32xf32>
    %125 = tpu.matmul %123, %124, %cst_67 {dimension_numbers = #tpu.dot_dimension_numbers<[1], [0], [0], [1], [0, 0, 1, 1], [], []>} : vector<8x32xbf16>, vector<32x32xbf16>, vector<8x32xf32> -> vector<8x32xf32>
    %c0_68 = arith.constant 0 : index
    %c0_69 = arith.constant 0 : index
    %126 = vector.load %arg9[%c0_68, %c0_69] : memref<1x32xf32, #tpu.memory_space<vmem>>, vector<1x32xf32>
    %127 = vector.broadcast %126 : vector<1x32xf32> to vector<8x32xf32>
    %128 = arith.addf %125, %127 : vector<8x32xf32>
    %129 = arith.addf %128, %6 : vector<8x32xf32>
    %c0_70 = arith.constant 0 : index
    %c0_71 = arith.constant 0 : index
    %c0_72 = arith.constant 0 : index
    %130 = vector.load %arg12[%c0_70, %c0_71, %c0_72] : memref<1x8x32xf32, #tpu.memory_space<vmem>>, vector<1x8x32xf32>
    %131 = vector.shape_cast %130 : vector<1x8x32xf32> to vector<8x32xf32>
    %132 = vector.shape_cast %129 : vector<8x32xf32> to vector<1x8x32xf32>
    tpu.vector_store %arg12[%c0_70, %c0_71, %c0_72], %132 {strides = array<i32>} : memref<1x8x32xf32, #tpu.memory_space<vmem>>, vector<1x8x32xf32>,
    return
  }
  func.func @transform_0(%arg0: i32, %arg1: i32) -> (i32, i32, i32) {
    %c0_i32 = arith.constant 0 : i32
    %c0_i32_0 = arith.constant 0 : i32
    return %arg0, %arg1, %c0_i32 : i32, i32, i32
  }
  func.func @transform_1(%arg0: i32, %arg1: i32) -> (i32, i32, i32) {
    %c0_i32 = arith.constant 0 : i32
    %c0_i32_0 = arith.constant 0 : i32
    %c0_i32_1 = arith.constant 0 : i32
    return %arg0, %c0_i32, %c0_i32_0 : i32, i32, i32
  }
  func.func @transform_2(%arg0: i32, %arg1: i32) -> (i32, i32) {
    %c0_i32 = arith.constant 0 : i32
    %c0_i32_0 = arith.constant 0 : i32
    %c0_i32_1 = arith.constant 0 : i32
    return %c0_i32, %c0_i32_0 : i32, i32
  }
  func.func @transform_3(%arg0: i32, %arg1: i32) -> (i32, i32) {
    %c0_i32 = arith.constant 0 : i32
    %c0_i32_0 = arith.constant 0 : i32
    %c0_i32_1 = arith.constant 0 : i32
    return %c0_i32, %c0_i32_0 : i32, i32
  }
  func.func @transform_4(%arg0: i32, %arg1: i32) -> (i32, i32) {
    %c0_i32 = arith.constant 0 : i32
    %c0_i32_0 = arith.constant 0 : i32
    %c0_i32_1 = arith.constant 0 : i32
    return %c0_i32, %c0_i32_0 : i32, i32
  }
  func.func @transform_5(%arg0: i32, %arg1: i32) -> (i32, i32) {
    %c0_i32 = arith.constant 0 : i32
    %c0_i32_0 = arith.constant 0 : i32
    %c0_i32_1 = arith.constant 0 : i32
    return %c0_i32, %c0_i32_0 : i32, i32
  }
  func.func @transform_6(%arg0: i32, %arg1: i32) -> (i32, i32) {
    %c0_i32 = arith.constant 0 : i32
    %c0_i32_0 = arith.constant 0 : i32
    %c0_i32_1 = arith.constant 0 : i32
    return %c0_i32, %c0_i32_0 : i32, i32
  }
  func.func @transform_7(%arg0: i32, %arg1: i32) -> (i32, i32) {
    %c0_i32 = arith.constant 0 : i32
    %c0_i32_0 = arith.constant 0 : i32
    %c0_i32_1 = arith.constant 0 : i32
    return %c0_i32, %c0_i32_0 : i32, i32
  }
  func.func @transform_8(%arg0: i32, %arg1: i32) -> (i32, i32) {
    %c0_i32 = arith.constant 0 : i32
    %c0_i32_0 = arith.constant 0 : i32
    %c0_i32_1 = arith.constant 0 : i32
    return %c0_i32, %c0_i32_0 : i32, i32
  }
  func.func @transform_9(%arg0: i32, %arg1: i32) -> (i32, i32) {
    %c0_i32 = arith.constant 0 : i32
    %c0_i32_0 = arith.constant 0 : i32
    %c0_i32_1 = arith.constant 0 : i32
    return %c0_i32, %c0_i32_0 : i32, i32
  }
  func.func @transform_10(%arg0: i32, %arg1: i32) -> (i32, i32, i32) {
    %c0_i32 = arith.constant 0 : i32
    %c0_i32_0 = arith.constant 0 : i32
    return %arg0, %arg1, %c0_i32 : i32, i32, i32
  }
  func.func @transform_11(%arg0: i32, %arg1: i32) -> (i32, i32, i32, i32) {
    %c0_i32 = arith.constant 0 : i32
    %c0_i32_0 = arith.constant 0 : i32
    %c0_i32_1 = arith.constant 0 : i32
    return %arg0, %c0_i32, %arg1, %c0_i32_0 : i32, i32, i32, i32
  }
}

</mosaic_0001>

<llo_original>
// kernel: tpu_custom_call.1
$region0: #{tpu_custom_call.1}
  #allocation0 [shape = 'u32[]', space=smem, size = 0x4, offset = 0x4, fixed_abs, tag = 'smem constant byte address 0x4 - core index']
  #allocation1 [shape = 'u32[72,128]{1,0:T(1,128)}', space=vmem, size = 0x9000, scoped, tag = 'internal scratch']
  #allocation2 [shape = 'bf16[8,64]{1,0:T(8,128)(2,1)}', space=vmem, size = 0x800, scoped, tag = 'scratch operand']
  #allocation3 [shape = 'f32[8,32]{1,0:T(8,128)}', space=vmem, size = 0x1000, scoped, tag = 'scratch operand']
  %s0 = inlined_call_operand.hbm [shape: f32[2,8,32], index: 0, kind: input, shape index: {}]
  %s1 = inlined_call_operand.hbm [shape: f32[2,8,32], index: 1, kind: input, shape index: {}]
  %s2 = inlined_call_operand.hbm [shape: bf16[32,32], index: 2, kind: input, shape index: {}]
  %s3 = inlined_call_operand.hbm [shape: bf16[32,64], index: 3, kind: input, shape index: {}]
  %s4 = inlined_call_operand.hbm [shape: bf16[32,32], index: 4, kind: input, shape index: {}]
  %s5 = inlined_call_operand.vmem [shape: f32[1,32], index: 5, kind: input, shape index: {}]
  %s6 = inlined_call_operand.vmem [shape: f32[1,64], index: 6, kind: input, shape index: {}]
  %s7 = inlined_call_operand.vmem [shape: f32[1,32], index: 7, kind: input, shape index: {}]
  %s8 = inlined_call_operand.vmem [shape: f32[1,32], index: 8, kind: input, shape index: {}]
  %s9 = inlined_call_operand.vmem [shape: f32[1,32], index: 9, kind: input, shape index: {}]
  %s10 = inlined_call_operand.hbm [shape: f32[2,8,32], index: 10, kind: output, shape index: {0}]
  %s11 = inlined_call_operand.hbm [shape: bf16[2,4,8,8], index: 11, kind: output, shape index: {1}]
  %12 = xla_tuple %s10, %s11
  %s13 = sld [smem:[#allocation0]]
  $region105: #{tpu_custom_call.1} parent=0
    _
  %s15 = ssub.s32 1, %s13
  %s16 = scalar_select 0, %s15, %s13
  $region1: #{tpu_custom_call.1} parent=0
    #allocation4 [shape = 'u8[8192]{0}', space=vmem, size = 0x2000, scoped, tag = 'input window, operand 0']
    #allocation5 [shape = 's32[2]{0}', space=sflag, size = 0x8, scoped, tag = 'scoped memory for tpu_custom_call.1']
    #allocation6 [shape = 's32[2]{0}', space=sflag, size = 0x8, scoped, tag = 'scoped memory for tpu_custom_call.1']
    #allocation7 [shape = 'u8[8192]{0}', space=vmem, size = 0x2000, scoped, tag = 'input window, operand 1']
    #allocation8 [shape = 's32[2]{0}', space=sflag, size = 0x8, scoped, tag = 'scoped memory for tpu_custom_call.1']
    #allocation9 [shape = 'u8[8192]{0}', space=vmem, size = 0x2000, scoped, tag = 'input window, operand 2, single buffered']
    #allocation10 [shape = 'u8[8192]{0}', space=vmem, size = 0x2000, scoped, tag = 'input window, operand 3, single buffered']
    #allocation11 [shape = 's32[1]{0}', space=sflag, size = 0x4, scoped, tag = 'scoped memory for tpu_custom_call.1']
    #allocation12 [shape = 'u8[8192]{0}', space=vmem, size = 0x2000, scoped, tag = 'input window, operand 4, single buffered']
    #allocation13 [shape = 'u8[8192]{0}', space=vmem, size = 0x2000, scoped, tag = 'output window, operand 0']
    #allocation14 [shape = 'u8[16384]{0}', space=vmem, size = 0x4000, scoped, tag = 'output window, operand 1']
    #allocation15 [shape = 's32[2]{0}', space=sflag, size = 0x8, scoped, tag = 'scoped memory for tpu_custom_call.1']
    %17 = vsyncpa [#allocation5], 0
    %s18 = scalar_lea.sflag [#allocation5], 1
    %19 = vsyncpa %s18, 0
    %20 = vsyncpa [#allocation8], 0
    %s21 = scalar_lea.sflag [#allocation8], 1
    %22 = vsyncpa %s21, 0
    %23 = vsyncpa [#allocation11], 0
    %24 = vsyncpa [#allocation6], 0
    %s25 = scalar_lea.sflag [#allocation6], 1
    %26 = vsyncpa %s25, 0
    %27 = vsyncpa [#allocation15], 0
    %s28 = scalar_lea.sflag [#allocation15], 1
    %29 = vsyncpa %s28, 0
    loop: start=0, step=1, limit=4
    $region2: #{tpu_custom_call.1} parent=1 // loop_pre_header
      _
    $region3: #{tpu_custom_call.1} parent=1 // loop_header
      %s31 = sphi 0, %s35
      %p32 = scmp.ge.s32.totalorder %s31, 4
      %s38 = sphi 0, %s50
      %s39 = sphi 0, %s46
      %s40 = sphi 0, %s38
      %s41 = sphi 0, %s39
      %s42 = sphi 0, %s40
      %s43 = sphi 0, %s41
      %s55 = sphi 0, %s57
      %s58 = sphi 0, %s55
      %s59 = sphi 0, %s58
      %s75 = sphi 0, %s59
      %s81 = sphi 0, %s83
      %s84 = sphi 0, %s81
      %s85 = sphi 0, %s84
      %s101 = sphi 0, %s85
      %s105 = sphi 0, %s105
      %s107 = sphi 0, %s105
      %s108 = sphi 0, %s107
      %s122 = sphi 0, %s108
      %s126 = sphi 0, %s126
      %s128 = sphi 0, %s126
      %s129 = sphi 0, %s128
      %s143 = sphi 0, %s129
      %s147 = sphi 0, %s147
      %s149 = sphi 0, %s147
      %s150 = sphi 0, %s149
      %s164 = sphi 0, %s150
      %s168 = sphi 0, %s168
      %s170 = sphi 0, %s168
      %s171 = sphi 0, %s170
      %s185 = sphi 0, %s171
      %s189 = sphi 0, %s189
      %s191 = sphi 0, %s189
      %s192 = sphi 0, %s191
      %s206 = sphi 0, %s192
      %s210 = sphi 0, %s210
      %s212 = sphi 0, %s210
      %s213 = sphi 0, %s212
      %s227 = sphi 0, %s213
      %s231 = sphi 0, %s231
      %s233 = sphi 0, %s231
      %s234 = sphi 0, %s233
      %s248 = sphi 0, %s234
      %s252 = sphi 0, %s252
      %s254 = sphi 0, %s252
      %s255 = sphi 0, %s254
      %s269 = sphi 0, %s255
      %s277 = sphi 0, %s279
      %s280 = sphi 0, %s277
      %s281 = sphi 0, %s280
      %s297 = sphi 0, %s281
      %s305 = sphi 0, %s307
      %s308 = sphi 0, %s305
      %s309 = sphi 0, %s308
      %s325 = sphi 0, %s309
    $region4: #{tpu_custom_call.1} parent=1 // loop_header_branch
      %34 = sbr.rel (%p32) target = $region8
    $region5: #{tpu_custom_call.1} parent=1 // loop_body
      %s36 = ssub.s32 %s31, 1
      %s37 = ssub.s32 %s31, 2
      %s44 = sadd.s32 1, %s39
      %p45 = scmp.ge.s32.totalorder %s44, 1
      %s46 = scalar_select %p45, 0, %s44
      %s47 = sadd.s32 1, %s38
      %s48 = scalar_select %p45, %s47, %s38
      %p49 = scmp.ge.s32.totalorder %s48, 2
      %s50 = scalar_select %p49, 0, %s48
      %s51 = ssub.s32 %s38, %s50
      %s52 = ssub.s32 %s39, %s46
      %s53 = sor.u32 %s51, %s52
      %p54 = scmp.eq.s32.totalorder %s53, 0
      %s56 = sadd.s32 %s55, 1
      %s57 = scalar_select %p54, %s55, %s56
      %p60 = pneg %p54
      %p61 = scmp.eq.s32.totalorder %s31, 1
      %p62 = por %p60, %p61
      %p63 = scmp.ne.s32.totalorder %s55, %s58
      %p64 = scmp.eq.s32.totalorder %s31, 0
      %p65 = por %p63, %p64
      %p66 = scmp.ne.s32.totalorder %s55, %s58
      %p67 = scmp.eq.s32.totalorder %s36, 1
      %p68 = por %p66, %p67
      %p69 = scmp.ne.s32.totalorder %s58, %s59
      %p70 = scmp.eq.s32.totalorder %s36, 0
      %p71 = por %p69, %p70
      %p72 = scmp.ne.s32.totalorder %s58, %s59
      %p73 = scmp.eq.s32.totalorder %s37, 1
      %p74 = por %p72, %p73
      %p76 = scmp.ne.s32.totalorder %s59, %s75
      %p77 = scmp.eq.s32.totalorder %s37, 0
      %p78 = por %p76, %p77
      %s79 = ssub.s32 %s38, %s50
      %p80 = scmp.eq.s32.totalorder %s79, 0
      %s82 = sadd.s32 %s81, 1
      %s83 = scalar_select %p80, %s81, %s82
      %p86 = pneg %p80
      %p87 = scmp.eq.s32.totalorder %s31, 1
      %p88 = por %p86, %p87
      %p89 = scmp.ne.s32.totalorder %s81, %s84
      %p90 = scmp.eq.s32.totalorder %s31, 0
      %p91 = por %p89, %p90
      %p92 = scmp.ne.s32.totalorder %s81, %s84
      %p93 = scmp.eq.s32.totalorder %s36, 1
      %p94 = por %p92, %p93
      %p95 = scmp.ne.s32.totalorder %s84, %s85
      %p96 = scmp.eq.s32.totalorder %s36, 0
      %p97 = por %p95, %p96
      %p98 = scmp.ne.s32.totalorder %s84, %s85
      %p99 = scmp.eq.s32.totalorder %s37, 1
      %p100 = por %p98, %p99
      %p102 = scmp.ne.s32.totalorder %s85, %s101
      %p103 = scmp.eq.s32.totalorder %s37, 0
      %p104 = por %p102, %p103
      %s106 = sadd.s32 %s105, 1
      %p109 = scmp.eq.s32.totalorder %s31, 1
      %p110 = scmp.ne.s32.totalorder %s105, %s107
      %p111 = scmp.eq.s32.totalorder %s31, 0
      %p112 = por %p110, %p111
      %p113 = scmp.ne.s32.totalorder %s105, %s107
      %p114 = scmp.eq.s32.totalorder %s36, 1
      %p115 = por %p113, %p114
      %p116 = scmp.ne.s32.totalorder %s107, %s108
      %p117 = scmp.eq.s32.totalorder %s36, 0
      %p118 = por %p116, %p117
      %p119 = scmp.ne.s32.totalorder %s107, %s108
      %p120 = scmp.eq.s32.totalorder %s37, 1
      %p121 = por %p119, %p120
      %p123 = scmp.ne.s32.totalorder %s108, %s122
      %p124 = scmp.eq.s32.totalorder %s37, 0
      %p125 = por %p123, %p124
      %s127 = sadd.s32 %s126, 1
      %p130 = scmp.eq.s32.totalorder %s31, 1
      %p131 = scmp.ne.s32.totalorder %s126, %s128
      %p132 = scmp.eq.s32.totalorder %s31, 0
      %p133 = por %p131, %p132
      %p134 = scmp.ne.s32.totalorder %s126, %s128
      %p135 = scmp.eq.s32.totalorder %s36, 1
      %p136 = por %p134, %p135
      %p137 = scmp.ne.s32.totalorder %s128, %s129
      %p138 = scmp.eq.s32.totalorder %s36, 0
      %p139 = por %p137, %p138
      %p140 = scmp.ne.s32.totalorder %s128, %s129
      %p141 = scmp.eq.s32.totalorder %s37, 1
      %p142 = por %p140, %p141
      %p144 = scmp.ne.s32.totalorder %s129, %s143
      %p145 = scmp.eq.s32.totalorder %s37, 0
      %p146 = por %p144, %p145
      %s148 = sadd.s32 %s147, 1
      %p151 = scmp.eq.s32.totalorder %s31, 1
      %p152 = scmp.ne.s32.totalorder %s147, %s149
      %p153 = scmp.eq.s32.totalorder %s31, 0
      %p154 = por %p152, %p153
      %p155 = scmp.ne.s32.totalorder %s147, %s149
      %p156 = scmp.eq.s32.totalorder %s36, 1
      %p157 = por %p155, %p156
      %p158 = scmp.ne.s32.totalorder %s149, %s150
      %p159 = scmp.eq.s32.totalorder %s36, 0
      %p160 = por %p158, %p159
      %p161 = scmp.ne.s32.totalorder %s149, %s150
      %p162 = scmp.eq.s32.totalorder %s37, 1
      %p163 = por %p161, %p162
      %p165 = scmp.ne.s32.totalorder %s150, %s164
      %p166 = scmp.eq.s32.totalorder %s37, 0
      %p167 = por %p165, %p166
      %s169 = sadd.s32 %s168, 1
      %p172 = scmp.eq.s32.totalorder %s31, 1
      %p173 = scmp.ne.s32.totalorder %s168, %s170
      %p174 = scmp.eq.s32.totalorder %s31, 0
      %p175 = por %p173, %p174
      %p176 = scmp.ne.s32.totalorder %s168, %s170
      %p177 = scmp.eq.s32.totalorder %s36, 1
      %p178 = por %p176, %p177
      %p179 = scmp.ne.s32.totalorder %s170, %s171
      %p180 = scmp.eq.s32.totalorder %s36, 0
      %p181 = por %p179, %p180
      %p182 = scmp.ne.s32.totalorder %s170, %s171
      %p183 = scmp.eq.s32.totalorder %s37, 1
      %p184 = por %p182, %p183
      %p186 = scmp.ne.s32.totalorder %s171, %s185
      %p187 = scmp.eq.s32.totalorder %s37, 0
      %p188 = por %p186, %p187
      %s190 = sadd.s32 %s189, 1
      %p193 = scmp.eq.s32.totalorder %s31, 1
      %p194 = scmp.ne.s32.totalorder %s189, %s191
      %p195 = scmp.eq.s32.totalorder %s31, 0
      %p196 = por %p194, %p195
      %p197 = scmp.ne.s32.totalorder %s189, %s191
      %p198 = scmp.eq.s32.totalorder %s36, 1
      %p199 = por %p197, %p198
      %p200 = scmp.ne.s32.totalorder %s191, %s192
      %p201 = scmp.eq.s32.totalorder %s36, 0
      %p202 = por %p200, %p201
      %p203 = scmp.ne.s32.totalorder %s191, %s192
      %p204 = scmp.eq.s32.totalorder %s37, 1
      %p205 = por %p203, %p204
      %p207 = scmp.ne.s32.totalorder %s192, %s206
      %p208 = scmp.eq.s32.totalorder %s37, 0
      %p209 = por %p207, %p208
      %s211 = sadd.s32 %s210, 1
      %p214 = scmp.eq.s32.totalorder %s31, 1
      %p215 = scmp.ne.s32.totalorder %s210, %s212
      %p216 = scmp.eq.s32.totalorder %s31, 0
      %p217 = por %p215, %p216
      %p218 = scmp.ne.s32.totalorder %s210, %s212
      %p219 = scmp.eq.s32.totalorder %s36, 1
      %p220 = por %p218, %p219
      %p221 = scmp.ne.s32.totalorder %s212, %s213
      %p222 = scmp.eq.s32.totalorder %s36, 0
      %p223 = por %p221, %p222
      %p224 = scmp.ne.s32.totalorder %s212, %s213
      %p225 = scmp.eq.s32.totalorder %s37, 1
      %p226 = por %p224, %p225
      %p228 = scmp.ne.s32.totalorder %s213, %s227
      %p229 = scmp.eq.s32.totalorder %s37, 0
      %p230 = por %p228, %p229
      %s232 = sadd.s32 %s231, 1
      %p235 = scmp.eq.s32.totalorder %s31, 1
      %p236 = scmp.ne.s32.totalorder %s231, %s233
      %p237 = scmp.eq.s32.totalorder %s31, 0
      %p238 = por %p236, %p237
      %p239 = scmp.ne.s32.totalorder %s231, %s233
      %p240 = scmp.eq.s32.totalorder %s36, 1
      %p241 = por %p239, %p240
      %p242 = scmp.ne.s32.totalorder %s233, %s234
      %p243 = scmp.eq.s32.totalorder %s36, 0
      %p244 = por %p242, %p243
      %p245 = scmp.ne.s32.totalorder %s233, %s234
      %p246 = scmp.eq.s32.totalorder %s37, 1
      %p247 = por %p245, %p246
      %p249 = scmp.ne.s32.totalorder %s234, %s248
      %p250 = scmp.eq.s32.totalorder %s37, 0
      %p251 = por %p249, %p250
      %s253 = sadd.s32 %s252, 1
      %p256 = scmp.eq.s32.totalorder %s31, 1
      %p257 = scmp.ne.s32.totalorder %s252, %s254
      %p258 = scmp.eq.s32.totalorder %s31, 0
      %p259 = por %p257, %p258
      %p260 = scmp.ne.s32.totalorder %s252, %s254
      %p261 = scmp.eq.s32.totalorder %s36, 1
      %p262 = por %p260, %p261
      %p263 = scmp.ne.s32.totalorder %s254, %s255
      %p264 = scmp.eq.s32.totalorder %s36, 0
      %p265 = por %p263, %p264
      %p266 = scmp.ne.s32.totalorder %s254, %s255
      %p267 = scmp.eq.s32.totalorder %s37, 1
      %p268 = por %p266, %p267
      %p270 = scmp.ne.s32.totalorder %s255, %s269
      %p271 = scmp.eq.s32.totalorder %s37, 0
      %p272 = por %p270, %p271
      %s273 = ssub.s32 %s38, %s50
      %s274 = ssub.s32 %s39, %s46
      %s275 = sor.u32 %s273, %s274
      %p276 = scmp.eq.s32.totalorder %s275, 0
      %s278 = sadd.s32 %s277, 1
      %s279 = scalar_select %p276, %s277, %s278
      %p282 = pneg %p276
      %p283 = scmp.eq.s32.totalorder %s31, 1
      %p284 = por %p282, %p283
      %p285 = scmp.ne.s32.totalorder %s277, %s280
      %p286 = scmp.eq.s32.totalorder %s31, 0
      %p287 = por %p285, %p286
      %p288 = scmp.ne.s32.totalorder %s277, %s280
      %p289 = scmp.eq.s32.totalorder %s36, 1
      %p290 = por %p288, %p289
      %p291 = scmp.ne.s32.totalorder %s280, %s281
      %p292 = scmp.eq.s32.totalorder %s36, 0
      %p293 = por %p291, %p292
      %p294 = scmp.ne.s32.totalorder %s280, %s281
      %p295 = scmp.eq.s32.totalorder %s37, 1
      %p296 = por %p294, %p295
      %p298 = scmp.ne.s32.totalorder %s281, %s297
      %p299 = scmp.eq.s32.totalorder %s37, 0
      %p300 = por %p298, %p299
      %s301 = ssub.s32 %s38, %s50
      %s302 = ssub.s32 %s39, %s46
      %s303 = sor.u32 %s301, %s302
      %p304 = scmp.eq.s32.totalorder %s303, 0
      %s306 = sadd.s32 %s305, 1
      %s307 = scalar_select %p304, %s305, %s306
      %p310 = pneg %p304
      %p311 = scmp.eq.s32.totalorder %s31, 1
      %p312 = por %p310, %p311
      %p313 = scmp.ne.s32.totalorder %s305, %s308
      %p314 = scmp.eq.s32.totalorder %s31, 0
      %p315 = por %p313, %p314
      %p316 = scmp.ne.s32.totalorder %s305, %s308
      %p317 = scmp.eq.s32.totalorder %s36, 1
      %p318 = por %p316, %p317
      %p319 = scmp.ne.s32.totalorder %s308, %s309
      %p320 = scmp.eq.s32.totalorder %s36, 0
      %p321 = por %p319, %p320
      %p322 = scmp.ne.s32.totalorder %s308, %s309
      %p323 = scmp.eq.s32.totalorder %s37, 1
      %p324 = por %p322, %p323
      %p326 = scmp.ne.s32.totalorder %s309, %s325
      %p327 = scmp.eq.s32.totalorder %s37, 0
      %p328 = por %p326, %p327
      %p329 = scmp.le.s32.totalorder 1, %s31
      %p330 = scmp.lt.s32.totalorder %s31, 3
      %p331 = pnand %p329, %p330
      %p332 = pneg %p331
      // Predicated region
      $region9: #{tpu_custom_call.1} parent=5 // pred_check
        _
      $region10: #{tpu_custom_call.1} parent=5 // pred_check_branch
        %334 = sbr.rel (%p331) target = $region12
      $region11: #{tpu_custom_call.1} parent=5 // pred_region
        %s335 = ssub.s32 %s31, 1
        // Predicated region
        $region13: #{tpu_custom_call.1} parent=11 // pred_check
          %p336 = pneg %p118
        $region14: #{tpu_custom_call.1} parent=11 // pred_check_branch
          %338 = sbr.rel (%p336) target = $region16
        $region15: #{tpu_custom_call.1} parent=11 // pred_region
          %340 = vsyncadd [#allocation8], 0
          %s341 = sshll.u32 %s2, 4
          %s342 = int_to_ptr.hbm [resolvable:$true] %s341
          %s343 = sshll.u32 [#allocation9], 4
          %s344 = int_to_ptr.vmem [resolvable:$true] %s343
          %349 = dma.hbm_to_vmem [thread:$0]  %s342, 256, %s344, [#allocation8], 64, 64, 4
        $region16: #{tpu_custom_call.1} parent=11 // pred_fallthru
          _
        // Predicated region
        $region17: #{tpu_custom_call.1} parent=11 // pred_check
          %p350 = pneg %p139
        $region18: #{tpu_custom_call.1} parent=11 // pred_check_branch
          %352 = sbr.rel (%p350) target = $region20
        $region19: #{tpu_custom_call.1} parent=11 // pred_region
          %354 = vsyncadd [#allocation11], 0
          %s355 = sshll.u32 %s3, 4
          %s356 = int_to_ptr.hbm [resolvable:$true] %s355
          %s357 = sshll.u32 [#allocation10], 4
          %s358 = int_to_ptr.vmem [resolvable:$true] %s357
          %363 = dma.hbm_to_vmem [thread:$0]  %s356, 256, %s358, [#allocation11], 64, 64, 4
        $region20: #{tpu_custom_call.1} parent=11 // pred_fallthru
          _
        // Predicated region
        $region21: #{tpu_custom_call.1} parent=11 // pred_check
          %p364 = pneg %p160
        $region22: #{tpu_custom_call.1} parent=11 // pred_check_branch
          %366 = sbr.rel (%p364) target = $region24
        $region23: #{tpu_custom_call.1} parent=11 // pred_region
          %368 = vsyncadd [#allocation11], 0
          %s369 = sshll.u32 %s4, 4
          %s370 = int_to_ptr.hbm [resolvable:$true] %s369
          %s371 = sshll.u32 [#allocation12], 4
          %s372 = int_to_ptr.vmem [resolvable:$true] %s371
          %377 = dma.hbm_to_vmem [thread:$0]  %s370, 256, %s372, [#allocation11], 64, 64, 4
        $region24: #{tpu_custom_call.1} parent=11 // pred_fallthru
          _
        // Predicated region
        $region25: #{tpu_custom_call.1} parent=11 // pred_check
          %p378 = pneg %p181
        $region26: #{tpu_custom_call.1} parent=11 // pred_check_branch
          %380 = sbr.rel (%p378) target = $region28
        $region27: #{tpu_custom_call.1} parent=11 // pred_region
          _
        $region28: #{tpu_custom_call.1} parent=11 // pred_fallthru
          _
        // Predicated region
        $region29: #{tpu_custom_call.1} parent=11 // pred_check
          %p381 = pneg %p202
        $region30: #{tpu_custom_call.1} parent=11 // pred_check_branch
          %383 = sbr.rel (%p381) target = $region32
        $region31: #{tpu_custom_call.1} parent=11 // pred_region
          _
        $region32: #{tpu_custom_call.1} parent=11 // pred_fallthru
          _
        // Predicated region
        $region33: #{tpu_custom_call.1} parent=11 // pred_check
          %p384 = pneg %p223
        $region34: #{tpu_custom_call.1} parent=11 // pred_check_branch
          %386 = sbr.rel (%p384) target = $region36
        $region35: #{tpu_custom_call.1} parent=11 // pred_region
          _
        $region36: #{tpu_custom_call.1} parent=11 // pred_fallthru
          _
        // Predicated region
        $region37: #{tpu_custom_call.1} parent=11 // pred_check
          %p387 = pneg %p244
        $region38: #{tpu_custom_call.1} parent=11 // pred_check_branch
          %389 = sbr.rel (%p387) target = $region40
        $region39: #{tpu_custom_call.1} parent=11 // pred_region
          _
        $region40: #{tpu_custom_call.1} parent=11 // pred_fallthru
          _
        // Predicated region
        $region41: #{tpu_custom_call.1} parent=11 // pred_check
          %p390 = pneg %p265
        $region42: #{tpu_custom_call.1} parent=11 // pred_check_branch
          %392 = sbr.rel (%p390) target = $region44
        $region43: #{tpu_custom_call.1} parent=11 // pred_region
          _
        $region44: #{tpu_custom_call.1} parent=11 // pred_fallthru
          _
      $region12: #{tpu_custom_call.1} parent=5 // pred_fallthru
        _
      %p393 = scmp.lt.s32.totalorder %s31, 2
      // Predicated region
      $region45: #{tpu_custom_call.1} parent=5 // pred_check
        %p394 = pneg %p393
      $region46: #{tpu_custom_call.1} parent=5 // pred_check_branch
        %396 = sbr.rel (%p394) target = $region48
      $region47: #{tpu_custom_call.1} parent=5 // pred_region
        // Predicated region
        $region49: #{tpu_custom_call.1} parent=47 // pred_check
          %p397 = pneg %p65
        $region50: #{tpu_custom_call.1} parent=47 // pred_check_branch
          %399 = sbr.rel (%p397) target = $region52
        $region51: #{tpu_custom_call.1} parent=47 // pred_region
          %s400 = sand.u32 %s55, 1
          %s401 = scalar_lea.sflag [#allocation5], %s400
          %s402 = sand.u32 %s55, 1
          %s403 = smul.addr %s402, 8
          %s404 = scalar_lea.vmem [#allocation4], %s403
          %406 = vsyncadd %s401, 0
          %s407 = sadd.s32 %s39, %s38
          %s408 = smul.addr %s407, 8
          %s409 = scalar_lea.hbm %s0, %s408
          %s411 = sshll.u32 %s409, 4
          %s412 = int_to_ptr.hbm [resolvable:$true] %s411
          %s413 = sshll.u32 %s404, 4
          %s414 = int_to_ptr.vmem [resolvable:$true] %s413
          %416 = dma.hbm_to_vmem [thread:$0]  %s412, 128, %s414, %s401
        $region52: #{tpu_custom_call.1} parent=47 // pred_fallthru
          _
        // Predicated region
        $region53: #{tpu_custom_call.1} parent=47 // pred_check
          %p417 = pneg %p91
        $region54: #{tpu_custom_call.1} parent=47 // pred_check_branch
          %419 = sbr.rel (%p417) target = $region56
        $region55: #{tpu_custom_call.1} parent=47 // pred_region
          %s420 = sand.u32 %s31, 1
          %s421 = scalar_lea.sflag [#allocation8], %s420
          %s422 = sand.u32 %s81, 1
          %s423 = smul.addr %s422, 8
          %s424 = scalar_lea.vmem [#allocation7], %s423
          %426 = vsyncadd %s421, 0
          %s427 = smul.addr %s38, 8
          %s428 = scalar_lea.hbm %s1, %s427
          %s430 = sshll.u32 %s428, 4
          %s431 = int_to_ptr.hbm [resolvable:$true] %s430
          %s432 = sshll.u32 %s424, 4
          %s433 = int_to_ptr.vmem [resolvable:$true] %s432
          %435 = dma.hbm_to_vmem [thread:$0]  %s431, 128, %s433, %s421
        $region56: #{tpu_custom_call.1} parent=47 // pred_fallthru
          _
      $region48: #{tpu_custom_call.1} parent=5 // pred_fallthru
        _
      %p436 = scmp.le.s32.totalorder 1, %s31
      %p437 = scmp.lt.s32.totalorder %s31, 3
      %p438 = pnand %p436, %p437
      %p439 = pneg %p438
      // Predicated region
      $region57: #{tpu_custom_call.1} parent=5 // pred_check
        _
      $region58: #{tpu_custom_call.1} parent=5 // pred_check_branch
        %441 = sbr.rel (%p438) target = $region60
      $region59: #{tpu_custom_call.1} parent=5 // pred_region
        %s442 = ssub.s32 %s31, 1
        %s443 = sand.u32 %s58, 1
        %s444 = scalar_lea.sflag [#allocation5], %s443
        %s445 = sand.u32 %s58, 1
        %s446 = smul.addr %s445, 8
        %s447 = scalar_lea.vmem [#allocation4], %s446
        // Predicated region
        $region61: #{tpu_custom_call.1} parent=59 // pred_check
          %p448 = pneg %p71
        $region62: #{tpu_custom_call.1} parent=59 // pred_check_branch
          %450 = sbr.rel (%p448) target = $region64
        $region63: #{tpu_custom_call.1} parent=59 // pred_region
          %452 = dma.done %s444, 128
        $region64: #{tpu_custom_call.1} parent=59 // pred_fallthru
          _
        %s453 = sand.u32 %s36, 1
        %s454 = scalar_lea.sflag [#allocation8], %s453
        %s455 = sand.u32 %s84, 1
        %s456 = smul.addr %s455, 8
        %s457 = scalar_lea.vmem [#allocation7], %s456
        // Predicated region
        $region65: #{tpu_custom_call.1} parent=59 // pred_check
          %p458 = pneg %p97
        $region66: #{tpu_custom_call.1} parent=59 // pred_check_branch
          %460 = sbr.rel (%p458) target = $region68
        $region67: #{tpu_custom_call.1} parent=59 // pred_region
          %462 = dma.done %s454, 128
        $region68: #{tpu_custom_call.1} parent=59 // pred_fallthru
          _
        // Predicated region
        $region69: #{tpu_custom_call.1} parent=59 // pred_check
          %p463 = pneg %p118
        $region70: #{tpu_custom_call.1} parent=59 // pred_check_branch
          %465 = sbr.rel (%p463) target = $region72
        $region71: #{tpu_custom_call.1} parent=59 // pred_region
          %467 = dma.done [#allocation8], 256
        $region72: #{tpu_custom_call.1} parent=59 // pred_fallthru
          _
        // Predicated region
        $region73: #{tpu_custom_call.1} parent=59 // pred_check
          %p468 = pneg %p139
        $region74: #{tpu_custom_call.1} parent=59 // pred_check_branch
          %470 = sbr.rel (%p468) target = $region76
        $region75: #{tpu_custom_call.1} parent=59 // pred_region
          %472 = dma.done [#allocation11], 256
        $region76: #{tpu_custom_call.1} parent=59 // pred_fallthru
          _
        // Predicated region
        $region77: #{tpu_custom_call.1} parent=59 // pred_check
          %p473 = pneg %p160
        $region78: #{tpu_custom_call.1} parent=59 // pred_check_branch
          %475 = sbr.rel (%p473) target = $region80
        $region79: #{tpu_custom_call.1} parent=59 // pred_region
          %477 = dma.done [#allocation11], 256
        $region80: #{tpu_custom_call.1} parent=59 // pred_fallthru
          _
        %s478 = sand.u32 %s58, 1
        %s479 = scalar_lea.sflag [#allocation5], %s478
        %s480 = sand.u32 %s58, 1
        %s481 = smul.addr %s480, 8
        %s482 = scalar_lea.vmem [#allocation4], %s481
        %p483 = pneg %p71
        %p484 = pneg %p68
        %s485 = sand.u32 %s36, 1
        %s486 = scalar_lea.sflag [#allocation8], %s485
        %s487 = sand.u32 %s84, 1
        %s488 = smul.addr %s487, 8
        %s489 = scalar_lea.vmem [#allocation7], %s488
        %p490 = pneg %p97
        %p491 = pneg %p94
        %p492 = pneg %p118
        %p493 = pneg %p115
        %p494 = pneg %p139
        %p495 = pneg %p136
        %p496 = pneg %p160
        %p497 = pneg %p157
        %p498 = pneg %p181
        %p499 = pneg %p178
        %p500 = pneg %p202
        %p501 = pneg %p199
        %p502 = pneg %p223
        %p503 = pneg %p220
        %p504 = pneg %p244
        %p505 = pneg %p241
        %p506 = pneg %p265
        %p507 = pneg %p262
        %p508 = pneg %p293
        %p509 = pneg %p290
        %s510 = sand.u32 %s280, 1
        %s511 = scalar_lea.sflag [#allocation6], %s510
        %s512 = sand.u32 %s280, 1
        %s513 = smul.addr %s512, 8
        %s514 = scalar_lea.vmem [#allocation13], %s513
        %p515 = pneg %p321
        %p516 = pneg %p318
        %s517 = sand.u32 %s308, 1
        %s518 = scalar_lea.sflag [#allocation15], %s517
        %s519 = sand.u32 %s308, 1
        %s520 = smul.addr %s519, 16
        %s521 = scalar_lea.vmem [#allocation14], %s520
        %v523 = vld [vmem:[%s8] sm:$0x1]
        %v524 = vld [vmem:[%s9] sm:$0x1]
        %p525 = scmp.eq.s32.totalorder %s41, 0
        // Predicated region
        $region81: #{tpu_custom_call.1} parent=59 // pred_check
          %p526 = pneg %p525
        $region82: #{tpu_custom_call.1} parent=59 // pred_check_branch
          %528 = sbr.rel (%p526) target = $region84
        $region83: #{tpu_custom_call.1} parent=59 // pred_region
          %v529 = vld [vmem:[%s457] sm:$0xff]
          %vm530 = vcmask 261120
          %v531 = vsel %vm530, %v529, 0.0
          %532 = vadd.xlane.f32.xlu0 %v531
          %v533 = vpop.xlane.xlu0 %532
          %v534 = vrcp.pop 32.0
          %v535 = vmul.f32 32.0, %v534
          %v536 = vsub.f32 1.0, %v535
          %v537 = vmul.f32 %v534, %v536
          %v538 = vadd.f32 %v534, %v537
          %vm539 = vweird.f32 %v534
          %v540 = vsel %vm539, %v534, %v538
          %v541 = vmul.f32 %v533, %v540
          %v542 = vsub.f32 %v529, %v541
          %v543 = vmul.f32 %v542, %v542
          %v544 = vsel %vm530, %v543, 0.0
          %545 = vadd.xlane.f32.xlu0 %v544
          %v546 = vpop.xlane.xlu0 %545
          %v547 = vmul.f32 %v546, %v540
          %v548 = vadd.f32 %v547, 1e-06
          %v549 = vrsqrt.pop %v548
          %v550 = vmul.f32 %v549, %v548
          %v551 = vmul.f32 %v550, %v549
          %v552 = vmul.f32 0.5, %v551
          %v553 = vsub.f32 1.5, %v552
          %v554 = vmul.f32 %v549, %v553
          %vm555 = vweird.f32 %v548
          %vm556 = vweird.f32 %v549
          %vm557 = vmor %vm555, %vm556
          %v558 = vsel %vm557, %v549, %v554
          %v559 = vmul.f32 %v542, %v558
          %v561 = vperm.slane %v523, 0
          %v563 = vmul.f32 %v559, %v561
          %v565 = vperm.slane %v524, 0
          %v567 = vadd.f32 %v563, %v565
          %v568 = vpack.c.bf16 %v567, %v567
          %v569 = vld [vmem:[#allocation10] sm:$0xf]
          %v570 = vld [vmem:[#allocation10 + $0x4] sm:$0xf]
          %v571 = vld [vmem:[#allocation10 + $0x8] sm:$0xf]
          %v572 = vld [vmem:[#allocation10 + $0xc] sm:$0xf]
          %v573 = vld [vmem:[%s6] sm:$0x1]
          %v575 = vperm.slane %v573, 0
          %v581 = vunpack.c.l.b16 %v569
          %v582 = vunpack.c.l.b16 %v570
          %v583 = vunpack.c.l.b16 %v571
          %v584 = vunpack.c.l.b16 %v572
          %v585 = vpack.c.b16 %v582, %v581
          %v586 = vpack.c.b16 %v584, %v583
          %v590 = vsel %vm530, %v568, 0
          %592 = vmatpush.bf16.msra.mxu0 0
          %593 = vmatpush.bf16.msra.mxu0 0
          %594 = vmatpush.bf16.msra.mxu0 0
          %595 = vmatpush.bf16.msra.mxu0 0
          %596 = vmatpush.bf16.msra.mxu0 0
          %597 = vmatpush.bf16.msra.mxu0 0
          %598 = vmatpush.bf16.msra.mxu0 %v586
          %599 = vmatpush.bf16.msra.mxu0 %v585
          %600 = vmatmul.bf16.gmra.mxu0 %v590
          %v601 = vpop.f32.mrf.mxu0
          %v602 = vadd.f32 %v575, %v601
          %v603 = vpop.f32.mrf.mxu0
          %604 = vdwg.mxu0
          %v605 = vpack.c.bf16 %v602, %v602
          %vm606 = vcmask 519168
          %607 = vst.msk [vmem:[#allocation2] sm:$0xf] %vm606, %v605
        $region84: #{tpu_custom_call.1} parent=59 // pred_fallthru
          _
        %v608 = vld [vmem:[%s447] sm:$0xff]
        %vm609 = vcmask 261120
        %v610 = vsel %vm609, %v608, 0.0
        %611 = vadd.xlane.f32.xlu0 %v610
        %v612 = vpop.xlane.xlu0 %611
        %v613 = vrcp.pop 32.0
        %v614 = vmul.f32 32.0, %v613
        %v615 = vsub.f32 1.0, %v614
        %v616 = vmul.f32 %v613, %v615
        %v617 = vadd.f32 %v613, %v616
        %vm618 = vweird.f32 %v613
        %v619 = vsel %vm618, %v613, %v617
        %v620 = vmul.f32 %v612, %v619
        %v621 = vsub.f32 %v608, %v620
        %v622 = vmul.f32 %v621, %v621
        %v623 = vsel %vm609, %v622, 0.0
        %624 = vadd.xlane.f32.xlu0 %v623
        %v625 = vpop.xlane.xlu0 %624
        %v626 = vmul.f32 %v625, %v619
        %v627 = vadd.f32 %v626, 1e-06
        %v628 = vrsqrt.pop %v627
        %v629 = vmul.f32 %v628, %v627
        %v630 = vmul.f32 %v629, %v628
        %v631 = vmul.f32 0.5, %v630
        %v632 = vsub.f32 1.5, %v631
        %v633 = vmul.f32 %v628, %v632
        %vm634 = vweird.f32 %v627
        %vm635 = vweird.f32 %v628
        %vm636 = vmor %vm634, %vm635
        %v637 = vsel %vm636, %v628, %v633
        %v638 = vmul.f32 %v621, %v637
        %v640 = vperm.slane %v523, 0
        %v642 = vmul.f32 %v638, %v640
        %v644 = vperm.slane %v524, 0
        %v646 = vadd.f32 %v642, %v644
        %v647 = vpack.c.bf16 %v646, %v646
        %v648 = vld [vmem:[#allocation9] sm:$0xf]
        %v649 = vld [vmem:[#allocation9 + $0x4] sm:$0xf]
        %v650 = vld [vmem:[#allocation9 + $0x8] sm:$0xf]
        %v651 = vld [vmem:[#allocation9 + $0xc] sm:$0xf]
        %v652 = vld [vmem:[%s5] sm:$0x1]
        %v654 = vperm.slane %v652, 0
        %v660 = vunpack.c.l.b16 %v648
        %v661 = vunpack.c.l.b16 %v649
        %v662 = vunpack.c.l.b16 %v650
        %v663 = vunpack.c.l.b16 %v651
        %v664 = vpack.c.b16 %v661, %v660
        %v665 = vpack.c.b16 %v663, %v662
        %v669 = vsel %vm609, %v647, 0
        %671 = vmatpush.bf16.msra.mxu0 0
        %672 = vmatpush.bf16.msra.mxu0 0
        %673 = vmatpush.bf16.msra.mxu0 0
        %674 = vmatpush.bf16.msra.mxu0 0
        %675 = vmatpush.bf16.msra.mxu0 0
        %676 = vmatpush.bf16.msra.mxu0 0
        %677 = vmatpush.bf16.msra.mxu0 %v665
        %678 = vmatpush.bf16.msra.mxu0 %v664
        %679 = vmatmul.bf16.gmra.mxu0 %v669
        %v680 = vpop.f32.mrf.mxu0
        %v681 = vadd.f32 %v654, %v680
        %v682 = vpop.f32.mrf.mxu0
        %683 = vdwg.mxu0
        %v684 = vmul.f32 %v681, 0.35355338
        %v685 = vpack.c.bf16 %v684, %v684
        %v686 = vld [vmem:[#allocation2] sm:$0xf]
        %vm687 = vcmask 64512
        %v689 = vsel %vm687, %v685, 0
        %v692 = vsel %vm687, %v686, 0
        %694 = vmatpush.bf16.xpose.msra.mxu0 0
        %695 = vmatpush.bf16.xpose.msra.mxu0 0
        %696 = vmatpush.bf16.xpose.msra.mxu0 0
        %697 = vmatpush.bf16.xpose.msra.mxu0 0
        %698 = vmatpush.bf16.xpose.msra.mxu0 0
        %699 = vmatpush.bf16.xpose.msra.mxu0 0
        %700 = vmatpush.bf16.xpose.msra.mxu0 0
        %701 = vmatpush.bf16.xpose.msra.mxu0 %v692
        %702 = vmatmul.bf16.gmra.mxu0 %v689
        %v703 = vpop.f32.mrf.mxu0
        %v704 = vadd.f32 0.0, %v703
        %v705 = vpop.f32.mrf.mxu0
        %706 = vdwg.mxu0
        %v707 = vsel %vm687, %v704, -inf
        %708 = vmax.xlane.f32.xlu0 %v707
        %v709 = vpop.xlane.xlu0 %708
        %v710 = vsub.f32 %v704, %v709
        %v711 = vmul.f32 %v710, 1.442695
        %v712 = vpow.pop %v711
        %v713 = vsel %vm687, %v712, 0.0
        %714 = vadd.xlane.f32.xlu0 %v713
        %v715 = vpop.xlane.xlu0 %714
        %v716 = vrcp.pop %v715
        %v717 = vmul.f32 %v712, %v716
        %v718 = vpack.c.bf16 %v717, %v717
        %vm719 = vcmask 60416
        %720 = vst.msk [vmem:[%s521] sm:$0xf] %vm719, %v718
        %v722 = vunpack.c.l.b16 %v686
        %v723 = vpack.c.b16 %v722, %v722
        %724 = vrot.lane.b32.xlu0 %v723, 96
        %v725 = vpop.permute.xlu0 %724
        %v727 = vsel %vm687, %v718, 0
        %vm729 = vcmask 1043456
        %v731 = vsel %vm729, %v725, 0
        %733 = vmatpush.bf16.msra.mxu0 0
        %734 = vmatpush.bf16.msra.mxu0 0
        %735 = vmatpush.bf16.msra.mxu0 0
        %736 = vmatpush.bf16.msra.mxu0 0
        %737 = vmatpush.bf16.msra.mxu0 0
        %738 = vmatpush.bf16.msra.mxu0 0
        %739 = vmatpush.bf16.msra.mxu0 0
        %740 = vmatpush.bf16.msra.mxu0 %v731
        %741 = vmatmul.bf16.gmra.mxu0 %v727
        %v742 = vpop.f32.mrf.mxu0
        %v743 = vadd.f32 0.0, %v742
        %v744 = vpop.f32.mrf.mxu0
        %745 = vdwg.mxu0
        %746 = vst.msk [vmem:[#allocation3] sm:$0xff] %vm687, %v743
        %v747 = vld [vmem:[#allocation2] sm:$0xf]
        %v749 = vunpack.c.l.b16 %v685
        %v750 = vpack.c.b16 %v749, %v749
        %751 = vrot.lane.b32.xlu0 %v750, 120
        %v752 = vpop.permute.xlu0 %751
        %v754 = vunpack.c.l.b16 %v747
        %v755 = vpack.c.b16 %v754, %v754
        %756 = vrot.lane.b32.xlu0 %v755, 120
        %v757 = vpop.permute.xlu0 %756
        %v759 = vsel %vm687, %v752, 0
        %v762 = vsel %vm687, %v757, 0
        %764 = vmatpush.bf16.xpose.msra.mxu0 0
        %765 = vmatpush.bf16.xpose.msra.mxu0 0
        %766 = vmatpush.bf16.xpose.msra.mxu0 0
        %767 = vmatpush.bf16.xpose.msra.mxu0 0
        %768 = vmatpush.bf16.xpose.msra.mxu0 0
        %769 = vmatpush.bf16.xpose.msra.mxu0 0
        %770 = vmatpush.bf16.xpose.msra.mxu0 0
        %771 = vmatpush.bf16.xpose.msra.mxu0 %v762
        %772 = vmatmul.bf16.gmra.mxu0 %v759
        %v773 = vpop.f32.mrf.mxu0
        %v774 = vadd.f32 0.0, %v773
        %v775 = vpop.f32.mrf.mxu0
        %776 = vdwg.mxu0
        %v777 = vsel %vm687, %v774, -inf
        %778 = vmax.xlane.f32.xlu0 %v777
        %v779 = vpop.xlane.xlu0 %778
        %v780 = vsub.f32 %v774, %v779
        %v781 = vmul.f32 %v780, 1.442695
        %v782 = vpow.pop %v781
        %v783 = vsel %vm687, %v782, 0.0
        %784 = vadd.xlane.f32.xlu0 %v783
        %v785 = vpop.xlane.xlu0 %784
        %v786 = vrcp.pop %v785
        %v787 = vmul.f32 %v782, %v786
        %v788 = vpack.c.bf16 %v787, %v787
        %s789 = scalar_lea.vmem %s521, 4 [#allocation14]
        %790 = vst.msk [vmem:[%s789] sm:$0xf] %vm719, %v788
        %791 = vrot.lane.b32.xlu0 %v755, 88
        %v792 = vpop.permute.xlu0 %791
        %v794 = vsel %vm687, %v788, 0
        %v797 = vsel %vm729, %v792, 0
        %799 = vmatpush.bf16.msra.mxu0 0
        %800 = vmatpush.bf16.msra.mxu0 0
        %801 = vmatpush.bf16.msra.mxu0 0
        %802 = vmatpush.bf16.msra.mxu0 0
        %803 = vmatpush.bf16.msra.mxu0 0
        %804 = vmatpush.bf16.msra.mxu0 0
        %805 = vmatpush.bf16.msra.mxu0 0
        %806 = vmatpush.bf16.msra.mxu0 %v797
        %807 = vmatmul.bf16.gmra.mxu0 %v794
        %v808 = vpop.f32.mrf.mxu0
        %v809 = vadd.f32 0.0, %v808
        %v810 = vpop.f32.mrf.mxu0
        %811 = vdwg.mxu0
        %813 = vrot.lane.b32.xlu0 %v809, 8
        %v814 = vpop.permute.xlu0 %813
        %vm816 = vcmask 130112
        %817 = vst.msk [vmem:[#allocation3] sm:$0xff] %vm816, %v814
        %v818 = vld [vmem:[#allocation2] sm:$0xf]
        %819 = vrot.lane.b32.xlu0 %v750, 112
        %v820 = vpop.permute.xlu0 %819
        %v822 = vunpack.c.l.b16 %v818
        %v823 = vpack.c.b16 %v822, %v822
        %824 = vrot.lane.b32.xlu0 %v823, 112
        %v825 = vpop.permute.xlu0 %824
        %v827 = vsel %vm687, %v820, 0
        %v830 = vsel %vm687, %v825, 0
        %832 = vmatpush.bf16.xpose.msra.mxu0 0
        %833 = vmatpush.bf16.xpose.msra.mxu0 0
        %834 = vmatpush.bf16.xpose.msra.mxu0 0
        %835 = vmatpush.bf16.xpose.msra.mxu0 0
        %836 = vmatpush.bf16.xpose.msra.mxu0 0
        %837 = vmatpush.bf16.xpose.msra.mxu0 0
        %838 = vmatpush.bf16.xpose.msra.mxu0 0
        %839 = vmatpush.bf16.xpose.msra.mxu0 %v830
        %840 = vmatmul.bf16.gmra.mxu0 %v827
        %v841 = vpop.f32.mrf.mxu0
        %v842 = vadd.f32 0.0, %v841
        %v843 = vpop.f32.mrf.mxu0
        %844 = vdwg.mxu0
        %v845 = vsel %vm687, %v842, -inf
        %846 = vmax.xlane.f32.xlu0 %v845
        %v847 = vpop.xlane.xlu0 %846
        %v848 = vsub.f32 %v842, %v847
        %v849 = vmul.f32 %v848, 1.442695
        %v850 = vpow.pop %v849
        %v851 = vsel %vm687, %v850, 0.0
        %852 = vadd.xlane.f32.xlu0 %v851
        %v853 = vpop.xlane.xlu0 %852
        %v854 = vrcp.pop %v853
        %v855 = vmul.f32 %v850, %v854
        %v856 = vpack.c.bf16 %v855, %v855
        %s857 = scalar_lea.vmem %s521, 8 [#allocation14]
        %858 = vst.msk [vmem:[%s857] sm:$0xf] %vm719, %v856
        %859 = vrot.lane.b32.xlu0 %v823, 80
        %v860 = vpop.permute.xlu0 %859
        %v862 = vsel %vm687, %v856, 0
        %v865 = vsel %vm729, %v860, 0
        %867 = vmatpush.bf16.msra.mxu0 0
        %868 = vmatpush.bf16.msra.mxu0 0
        %869 = vmatpush.bf16.msra.mxu0 0
        %870 = vmatpush.bf16.msra.mxu0 0
        %871 = vmatpush.bf16.msra.mxu0 0
        %872 = vmatpush.bf16.msra.mxu0 0
        %873 = vmatpush.bf16.msra.mxu0 0
        %874 = vmatpush.bf16.msra.mxu0 %v865
        %875 = vmatmul.bf16.gmra.mxu0 %v862
        %v876 = vpop.f32.mrf.mxu0
        %v877 = vadd.f32 0.0, %v876
        %v878 = vpop.f32.mrf.mxu0
        %879 = vdwg.mxu0
        %881 = vrot.lane.b32.xlu0 %v877, 16
        %v882 = vpop.permute.xlu0 %881
        %vm884 = vcmask 195712
        %885 = vst.msk [vmem:[#allocation3] sm:$0xff] %vm884, %v882
        %v886 = vld [vmem:[#allocation2] sm:$0xf]
        %887 = vrot.lane.b32.xlu0 %v750, 104
        %v888 = vpop.permute.xlu0 %887
        %v890 = vunpack.c.l.b16 %v886
        %v891 = vpack.c.b16 %v890, %v890
        %892 = vrot.lane.b32.xlu0 %v891, 104
        %v893 = vpop.permute.xlu0 %892
        %v895 = vsel %vm687, %v888, 0
        %v898 = vsel %vm687, %v893, 0
        %900 = vmatpush.bf16.xpose.msra.mxu0 0
        %901 = vmatpush.bf16.xpose.msra.mxu0 0
        %902 = vmatpush.bf16.xpose.msra.mxu0 0
        %903 = vmatpush.bf16.xpose.msra.mxu0 0
        %904 = vmatpush.bf16.xpose.msra.mxu0 0
        %905 = vmatpush.bf16.xpose.msra.mxu0 0
        %906 = vmatpush.bf16.xpose.msra.mxu0 0
        %907 = vmatpush.bf16.xpose.msra.mxu0 %v898
        %908 = vmatmul.bf16.gmra.mxu0 %v895
        %v909 = vpop.f32.mrf.mxu0
        %v910 = vadd.f32 0.0, %v909
        %v911 = vpop.f32.mrf.mxu0
        %912 = vdwg.mxu0
        %v913 = vsel %vm687, %v910, -inf
        %914 = vmax.xlane.f32.xlu0 %v913
        %v915 = vpop.xlane.xlu0 %914
        %v916 = vsub.f32 %v910, %v915
        %v917 = vmul.f32 %v916, 1.442695
        %v918 = vpow.pop %v917
        %v919 = vsel %vm687, %v918, 0.0
        %920 = vadd.xlane.f32.xlu0 %v919
        %v921 = vpop.xlane.xlu0 %920
        %v922 = vrcp.pop %v921
        %v923 = vmul.f32 %v918, %v922
        %v924 = vpack.c.bf16 %v923, %v923
        %s925 = scalar_lea.vmem %s521, 12 [#allocation14]
        %926 = vst.msk [vmem:[%s925] sm:$0xf] %vm719, %v924
        %927 = vrot.lane.b32.xlu0 %v891, 72
        %v928 = vpop.permute.xlu0 %927
        %v930 = vsel %vm687, %v924, 0
        %v933 = vsel %vm729, %v928, 0
        %935 = vmatpush.bf16.msra.mxu0 0
        %936 = vmatpush.bf16.msra.mxu0 0
        %937 = vmatpush.bf16.msra.mxu0 0
        %938 = vmatpush.bf16.msra.mxu0 0
        %939 = vmatpush.bf16.msra.mxu0 0
        %940 = vmatpush.bf16.msra.mxu0 0
        %941 = vmatpush.bf16.msra.mxu0 0
        %942 = vmatpush.bf16.msra.mxu0 %v933
        %943 = vmatmul.bf16.gmra.mxu0 %v930
        %v944 = vpop.f32.mrf.mxu0
        %v945 = vadd.f32 0.0, %v944
        %v946 = vpop.f32.mrf.mxu0
        %947 = vdwg.mxu0
        %949 = vrot.lane.b32.xlu0 %v945, 24
        %v950 = vpop.permute.xlu0 %949
        %vm952 = vcmask 261312
        %953 = vst.msk [vmem:[#allocation3] sm:$0xff] %vm952, %v950
        %v954 = vld [vmem:[#allocation3] sm:$0xff]
        %v955 = vpack.c.bf16 %v954, %v954
        %v956 = vld [vmem:[#allocation12] sm:$0xf]
        %v957 = vld [vmem:[#allocation12 + $0x4] sm:$0xf]
        %v958 = vld [vmem:[#allocation12 + $0x8] sm:$0xf]
        %v959 = vld [vmem:[#allocation12 + $0xc] sm:$0xf]
        %v960 = vld [vmem:[%s7] sm:$0x1]
        %v962 = vperm.slane %v960, 0
        %v968 = vunpack.c.l.b16 %v956
        %v969 = vunpack.c.l.b16 %v957
        %v970 = vunpack.c.l.b16 %v958
        %v971 = vunpack.c.l.b16 %v959
        %v972 = vpack.c.b16 %v969, %v968
        %v973 = vpack.c.b16 %v971, %v970
        %v977 = vsel %vm609, %v955, 0
        %979 = vmatpush.bf16.msra.mxu0 0
        %980 = vmatpush.bf16.msra.mxu0 0
        %981 = vmatpush.bf16.msra.mxu0 0
        %982 = vmatpush.bf16.msra.mxu0 0
        %983 = vmatpush.bf16.msra.mxu0 0
        %984 = vmatpush.bf16.msra.mxu0 0
        %985 = vmatpush.bf16.msra.mxu0 %v973
        %986 = vmatpush.bf16.msra.mxu0 %v972
        %987 = vmatmul.bf16.gmra.mxu0 %v977
        %v988 = vpop.f32.mrf.mxu0
        %v989 = vadd.f32 %v962, %v988
        %v990 = vpop.f32.mrf.mxu0
        %991 = vdwg.mxu0
        %v992 = vadd.f32 %v989, %v608
        %993 = vst.msk [vmem:[%s514] sm:$0xff] %vm609, %v992
        %s994 = sand.u32 %s280, 1
        %s995 = scalar_lea.sflag [#allocation6], %s994
        %s996 = sand.u32 %s280, 1
        %s997 = smul.addr %s996, 8
        %s998 = scalar_lea.vmem [#allocation13], %s997
        %s999 = sand.u32 %s308, 1
        %s1000 = scalar_lea.sflag [#allocation15], %s999
        %s1001 = sand.u32 %s308, 1
        %s1002 = smul.addr %s1001, 16
        %s1003 = scalar_lea.vmem [#allocation14], %s1002
        // Predicated region
        $region85: #{tpu_custom_call.1} parent=59 // pred_check
          %p1004 = pneg %p290
        $region86: #{tpu_custom_call.1} parent=59 // pred_check_branch
          %1006 = sbr.rel (%p1004) target = $region88
        $region87: #{tpu_custom_call.1} parent=59 // pred_region
          %1008 = vsyncadd %s995, 0
          %s1009 = sadd.s32 %s41, %s40
          %s1010 = smul.addr %s1009, 8
          %s1011 = scalar_lea.hbm %s10, %s1010
          %s1013 = sshll.u32 %s998, 4
          %s1014 = int_to_ptr.vmem [resolvable:$true] %s1013
          %s1015 = sshll.u32 %s1011, 4
          %s1016 = int_to_ptr.hbm [resolvable:$true] %s1015
          %1018 = dma.vmem_to_hbm [thread:$0]  %s1014, 128, %s1016, %s995
        $region88: #{tpu_custom_call.1} parent=59 // pred_fallthru
          _
        // Predicated region
        $region89: #{tpu_custom_call.1} parent=59 // pred_check
          %p1019 = pneg %p318
        $region90: #{tpu_custom_call.1} parent=59 // pred_check_branch
          %1021 = sbr.rel (%p1019) target = $region92
        $region91: #{tpu_custom_call.1} parent=59 // pred_region
          %1023 = vsyncadd %s1000, 0
          %s1024 = smul.addr %s40, 4
          %s1025 = sadd.s32 %s41, %s1024
          %s1026 = smul.addr %s1025, 4
          %s1027 = scalar_lea.hbm %s11, %s1026
          %s1028 = sshll.u32 %s1003, 4
          %s1029 = int_to_ptr.vmem [resolvable:$true] %s1028
          %s1030 = sshll.u32 %s1027, 4
          %s1031 = int_to_ptr.hbm [resolvable:$true] %s1030
          %1036 = dma.vmem_to_hbm [thread:$0]  %s1029, 256, %s1031, %s1000, 64, 64, 4
        $region92: #{tpu_custom_call.1} parent=59 // pred_fallthru
          _
      $region60: #{tpu_custom_call.1} parent=5 // pred_fallthru
        _
      %p1037 = scmp.le.s32.totalorder 2, %s31
      // Predicated region
      $region93: #{tpu_custom_call.1} parent=5 // pred_check
        %p1038 = pneg %p1037
      $region94: #{tpu_custom_call.1} parent=5 // pred_check_branch
        %1040 = sbr.rel (%p1038) target = $region96
      $region95: #{tpu_custom_call.1} parent=5 // pred_region
        %s1041 = ssub.s32 %s31, 2
        // Predicated region
        $region97: #{tpu_custom_call.1} parent=95 // pred_check
          %p1042 = pneg %p296
        $region98: #{tpu_custom_call.1} parent=95 // pred_check_branch
          %1044 = sbr.rel (%p1042) target = $region100
        $region99: #{tpu_custom_call.1} parent=95 // pred_region
          %s1045 = sand.u32 %s281, 1
          %s1046 = scalar_lea.sflag [#allocation6], %s1045
          %s1047 = sand.u32 %s281, 1
          %s1048 = smul.addr %s1047, 8
          %s1049 = scalar_lea.vmem [#allocation13], %s1048
          %1051 = dma.done %s1046, 128
        $region100: #{tpu_custom_call.1} parent=95 // pred_fallthru
          _
        // Predicated region
        $region101: #{tpu_custom_call.1} parent=95 // pred_check
          %p1052 = pneg %p324
        $region102: #{tpu_custom_call.1} parent=95 // pred_check_branch
          %1054 = sbr.rel (%p1052) target = $region104
        $region103: #{tpu_custom_call.1} parent=95 // pred_region
          %s1055 = sand.u32 %s309, 1
          %s1056 = scalar_lea.sflag [#allocation15], %s1055
          %s1057 = sand.u32 %s309, 1
          %s1058 = smul.addr %s1057, 16
          %s1059 = scalar_lea.vmem [#allocation14], %s1058
          %1061 = dma.done %s1056, 256
        $region104: #{tpu_custom_call.1} parent=95 // pred_fallthru
          _
      $region96: #{tpu_custom_call.1} parent=5 // pred_fallthru
        _
    $region6: #{tpu_custom_call.1} parent=1 // loop_footer
      %s35 = sadd.s32 1, %s31
    $region7: #{tpu_custom_call.1} parent=1 // loop_footer_branch
      %30 = sbr.rel target = $region3
    $region8: #{tpu_custom_call.1} parent=1 // loop_exit
      _
    %1062 = vsyncpa [#allocation5], 1
    %s1063 = scalar_lea.sflag [#allocation5], 1
    %1064 = vsyncpa %s1063, 1
    %1065 = vsyncpa [#allocation8], 1
    %s1066 = scalar_lea.sflag [#allocation8], 1
    %1067 = vsyncpa %s1066, 1
    %1068 = vsyncpa [#allocation11], 1
    %1069 = vsyncpa [#allocation6], 1
    %s1070 = scalar_lea.sflag [#allocation6], 1
    %1071 = vsyncpa %s1070, 1
    %1072 = vsyncpa [#allocation15], 1
    %s1073 = scalar_lea.sflag [#allocation15], 1
    %1074 = vsyncpa %s1073, 1

</llo_original>
